<compile_context>
chip_gen: v7x
topology: tpu7x:2x2x1
jax: 0.10.0
libtpu: 0.0.40
codegen_flags: <defaults>
</compile_context>

<pallas_src>
import functools

import jax
import jax.numpy as jnp
from jax.experimental import pallas as pl
from jax.experimental.pallas import tpu as pltpu


# ------------------------------- helpers --------------------------------------

def _layernorm(x, gamma, beta, eps=1e-5):
    mu = jnp.mean(x, axis=-1, keepdims=True)
    var = jnp.mean((x - mu) ** 2, axis=-1, keepdims=True)
    return (x - mu) * jax.lax.rsqrt(var + eps) * gamma + beta


def _vmem_limit_bytes():
    """Generation-aware VMEM budget: ~3/4 of physical, capped at 100 MiB.
    (v5e/v6e: 128 MiB -> 96 MiB; v7x: 64 MiB -> 48 MiB)."""
    cap = 64 * 1024 * 1024
    try:
        info = pltpu.get_tpu_info()
        cap = int(getattr(info, "vmem_capacity_bytes", cap))
    except Exception:
        pass
    return min(int(cap * 3 // 4), 100 * 1024 * 1024)


def _tile(n, pref):
    """Use `pref`-sized tiles when they divide n evenly, else the full extent."""
    return pref if (n > pref and n % pref == 0) else n


# ------------------------- fused transformer layers ---------------------------

def fused_layers_kernel(x_ref, vecs_ref, bqkv_ref, b1_ref,
                        wqkv_ref, wo_ref, w1_ref, w2_ref,
                        o_ref, x_scr, mask_scr, *, num_heads):
    """grid = (L,): one TransformerBlock per step.  The activation (B, T, C)
    stays VMEM-resident in x_scr across all layers; each layer's weights are
    streamed exactly once (index_map depends only on l)."""
    l = pl.program_id(0)
    n_layers = pl.num_programs(0)

    B, T, C = x_scr.shape
    H = num_heads
    D = C // H
    N = B * T

    @pl.when(l == 0)
    def _():
        x_scr[...] = x_ref[...]                         # load activation once
        row = jax.lax.broadcasted_iota(jnp.int32, (T, T), 0)
        col = jax.lax.broadcasted_iota(jnp.int32, (T, T), 1)
        # additive causal bias, built once and reused by every layer
        mask_scr[...] = jnp.where(col <= row, 0.0, -1e30).astype(jnp.float32)

    x = x_scr[...]                                      # (B, T, C) f32
    mask = mask_scr[...]                                # (T, T) f32

    ln1g = vecs_ref[0, 0]
    ln1b = vecs_ref[0, 1]
    bo = vecs_ref[0, 2]
    ln2g = vecs_ref[0, 3]
    ln2b = vecs_ref[0, 4]
    b2 = vecs_ref[0, 5]

    # ---------------- self-attention branch ----------------
    # batch folded into the matmul M dimension: (B*T, C) x (C, 3C)
    h = _layernorm(x, ln1g, ln1b).astype(jnp.bfloat16).reshape(N, C)
    qkv = (jnp.dot(h, wqkv_ref[0], preferred_element_type=jnp.float32)
           + bqkv_ref[0, 0])                            # 1/sqrt(D) folded into Wq/bq
    qkv = qkv.reshape(B, T, 3 * C)

    # heads as static lane slices; no explicit (T,H,D)->(H,T,D) transposes.
    # TODO(synk): flash-style key-tile blocking with running max/sum before
    # moving to production T (bounds the (T,T) live ranges / VMEM on v7x).
    heads = []
    for hh in range(H):
        qh = qkv[:, :, hh * D:(hh + 1) * D].astype(jnp.bfloat16)          # (B,T,D)
        kh = qkv[:, :, C + hh * D:C + (hh + 1) * D].astype(jnp.bfloat16)
        vh = qkv[:, :, 2 * C + hh * D:2 * C + (hh + 1) * D].astype(jnp.bfloat16)
        s = jnp.einsum('btd,bsd->bts', qh, kh,
                       preferred_element_type=jnp.float32)
        s = s + mask[None, :, :]
        e = jnp.exp(s - jnp.max(s, axis=-1, keepdims=True))
        p = e * pl.reciprocal(jnp.sum(e, axis=-1, keepdims=True), approx=True)
        heads.append(jnp.einsum('bts,bsd->btd', p.astype(jnp.bfloat16), vh,
                                preferred_element_type=jnp.float32))
    # lane-concat reconstructs the head-major flat layout (col = h*D + d)
    a = jnp.concatenate(heads, axis=-1).reshape(N, C)
    attn = jnp.dot(a.astype(jnp.bfloat16), wo_ref[0],
                   preferred_element_type=jnp.float32) + bo
    x = x + attn.reshape(B, T, C)

    # ---------------- feed-forward branch ----------------
    # TODO(synk): on v7x (64 MiB VMEM) add K-tiling / Buffered(1) for W1/W2 at
    # production C/F so the double-buffered per-layer weight set still fits.
    h2 = _layernorm(x, ln2g, ln2b).astype(jnp.bfloat16).reshape(N, C)
    f = jnp.dot(h2, w1_ref[0], preferred_element_type=jnp.float32) + b1_ref[0, 0]
    f = jnp.maximum(f, 0.0).astype(jnp.bfloat16)
    f = jnp.dot(f, w2_ref[0], preferred_element_type=jnp.float32) + b2
    x = x + f.reshape(B, T, C)

    x_scr[...] = x

    @pl.when(l == n_layers - 1)
    def _():
        o_ref[...] = x


# --------------------- final LayerNorm + vocab projection ---------------------

def head_kernel(x_ref, g_ref, b_ref, wp_ref, bp_ref, o_ref):
    h = _layernorm(x_ref[...], g_ref[0], b_ref[0]).astype(jnp.bfloat16)
    o_ref[...] = (jnp.dot(h, wp_ref[...], preferred_element_type=jnp.float32)
                  + bp_ref[0])


# ------------------------------ wrappers ---------------------------------------

def prepare_params(params, num_heads):
    """One-time weight prep: stack layers, fold 1/sqrt(D) into Q, coalesce QKV
    and the small per-layer vectors, store matmul weights in bf16."""
    C = params['tok_emb'].shape[1]
    D = C // num_heads
    scale = 1.0 / (float(D) ** 0.5)
    blocks = params['blocks']
    stk = lambda name: jnp.stack([b[name] for b in blocks], axis=0)

    wqkv = jnp.concatenate([stk('wq') * scale, stk('wk'), stk('wv')],
                           axis=-1).astype(jnp.bfloat16)          # (L, C, 3C)
    bqkv = jnp.concatenate([stk('bq') * scale, stk('bk'), stk('bv')],
                           axis=-1)                               # (L, 1, 3C)
    vecs = jnp.stack([stk('ln1_g')[:, 0], stk('ln1_b')[:, 0], stk('bo')[:, 0],
                      stk('ln2_g')[:, 0], stk('ln2_b')[:, 0], stk('b2')[:, 0]],
                     axis=1)                                      # (L, 6, C)
    return {
        'tok_emb': params['tok_emb'], 'pos_emb': params['pos_emb'],
        'vecs': vecs, 'bqkv': bqkv, 'b1': stk('b1'),              # (L, 1, F)
        'wqkv': wqkv,
        'wo': stk('wo').astype(jnp.bfloat16),
        'w1': stk('w1').astype(jnp.bfloat16),
        'w2': stk('w2').astype(jnp.bfloat16),
        'lnf_g': params['lnf_g'], 'lnf_b': params['lnf_b'],
        'wp': params['wp'].astype(jnp.bfloat16), 'bp': params['bp'],
    }


def transformer_forward(tokens, prepped, num_heads):
    """Full TransformerModel.forward (targets=None path): returns logits (B,T,V)."""
    B, T = tokens.shape
    C = prepped['tok_emb'].shape[1]
    V = prepped['wp'].shape[1]
    L = prepped['wqkv'].shape[0]
    F_ = prepped['w1'].shape[2]
    N = B * T
    vmem_limit = _vmem_limit_bytes()

    # Embedding gathers are glue; kept in plain JAX (XLA gather).
    x = (prepped['tok_emb'][tokens]
         + prepped['pos_emb'][jnp.arange(T)][None, :, :]).astype(jnp.float32)

    per_layer = lambda shape: pl.BlockSpec((1,) + shape, lambda l: (l, 0, 0))

    in_specs = [
        pl.BlockSpec((B, T, C), lambda l: (0, 0, 0)),   # x: fetched once (index fixed)
        per_layer((6, C)),                              # ln1g, ln1b, bo, ln2g, ln2b, b2
        per_layer((1, 3 * C)),                          # qkv bias (Q pre-scaled)
        per_layer((1, F_)),                             # b1
        per_layer((C, 3 * C)),                          # Wqkv
        per_layer((C, C)),                              # Wo
        per_layer((C, F_)),                             # W1
        per_layer((F_, C)),                             # W2
    ]
    out_spec = pl.BlockSpec((B, T, C), lambda l: (0, 0, 0))

    flops = L * (8 * N * C * C + 4 * N * T * C + 4 * N * C * F_)
    transc = L * B * num_heads * T * T
    bytes_accessed = (2 * B * T * C * 4
                      + L * (4 * C * C + 2 * C * F_) * 2
                      + L * (9 * C + F_) * 4)

    kern = functools.partial(fused_layers_kernel, num_heads=num_heads)
    # TODO(synk): on v7x add a parallel row-tile grid axis (grid=(rows, L)) so
    # both TensorCores get work once B*T is large enough.
    x_final = pl.pallas_call(
        kern,
        out_shape=jax.ShapeDtypeStruct((B, T, C), jnp.float32),
        grid=(L,),
        in_specs=in_specs,
        out_specs=out_spec,
        scratch_shapes=[pltpu.VMEM((B, T, C), jnp.float32),
                        pltpu.VMEM((T, T), jnp.float32)],
        compiler_params=pltpu.CompilerParams(
            dimension_semantics=("arbitrary",),
            vmem_limit_bytes=vmem_limit),
        cost_estimate=pl.CostEstimate(
            flops=flops, transcendentals=transc, bytes_accessed=bytes_accessed),
    )(x, prepped['vecs'], prepped['bqkv'], prepped['b1'],
      prepped['wqkv'], prepped['wo'], prepped['w1'], prepped['w2'])

    # ---- final LN + vocab projection: its own call, tiled over rows / vocab ----
    # TODO(synk): add a K (=C) reduction grid axis for production channel dims.
    xf = x_final.reshape(N, C)
    tm = _tile(N, 256)
    tv = _tile(V, 512)
    logits = pl.pallas_call(
        head_kernel,
        out_shape=jax.ShapeDtypeStruct((N, V), jnp.float32),
        grid=(N // tm, V // tv),
        in_specs=[pl.BlockSpec((tm, C), lambda i, j: (i, 0)),
                  pl.BlockSpec((1, C), lambda i, j: (0, 0)),
                  pl.BlockSpec((1, C), lambda i, j: (0, 0)),
                  pl.BlockSpec((C, tv), lambda i, j: (0, j)),
                  pl.BlockSpec((1, tv), lambda i, j: (0, j))],
        out_specs=pl.BlockSpec((tm, tv), lambda i, j: (i, j)),
        compiler_params=pltpu.CompilerParams(
            dimension_semantics=("parallel", "parallel"),
            vmem_limit_bytes=vmem_limit),
        cost_estimate=pl.CostEstimate(
            flops=2 * N * C * V, transcendentals=0,
            bytes_accessed=N * C * 4 + N * V * 4 + C * V * 2 + (V + 2 * C) * 4),
    )(xf, prepped['lnf_g'], prepped['lnf_b'], prepped['wp'], prepped['bp'])
    return logits.reshape(B, T, V)


# --------------------------- deterministic init -------------------------------

def init_params(key, vocab_size, channel_dim, context_window, num_layers):
    C, V, F_ = channel_dim, vocab_size, 4 * channel_dim
    n_keys = 16 + num_layers * 16
    ks = iter(jax.random.split(key, n_keys))
    nrm = lambda k, shape: (0.02 * jax.random.normal(k, shape)).astype(jnp.float32)

    params = {
        'tok_emb': nrm(next(ks), (V, C)),
        'pos_emb': nrm(next(ks), (context_window, C)),
        'lnf_g': jnp.ones((1, C), jnp.float32),
        'lnf_b': jnp.zeros((1, C), jnp.float32),
        'wp': nrm(next(ks), (C, V)),
        'bp': nrm(next(ks), (1, V)),
        'blocks': [],
    }
    for _ in range(num_layers):
        layer = {
            'ln1_g': jnp.ones((1, C), jnp.float32),
            'ln1_b': jnp.zeros((1, C), jnp.float32),
            'wq': nrm(next(ks), (C, C)), 'bq': nrm(next(ks), (1, C)),
            'wk': nrm(next(ks), (C, C)), 'bk': nrm(next(ks), (1, C)),
            'wv': nrm(next(ks), (C, C)), 'bv': nrm(next(ks), (1, C)),
            'wo': nrm(next(ks), (C, C)), 'bo': nrm(next(ks), (1, C)),
            'ln2_g': jnp.ones((1, C), jnp.float32),
            'ln2_b': jnp.zeros((1, C), jnp.float32),
            'w1': nrm(next(ks), (C, F_)), 'b1': nrm(next(ks), (1, F_)),
            'w2': nrm(next(ks), (F_, C)), 'b2': nrm(next(ks), (1, C)),
        }
        params['blocks'].append(layer)
    return params


# --------------------------- pure-JAX reference -------------------------------

def reference_forward(tokens, params, num_heads):
    B, T = tokens.shape
    x = params['tok_emb'][tokens] + params['pos_emb'][jnp.arange(T)][None]
    C = x.shape[-1]
    D = C // num_heads
    mask = jnp.tril(jnp.ones((T, T)))

    def ln(v, g, b, eps=1e-5):
        mu = v.mean(-1, keepdims=True)
        var = ((v - mu) ** 2).mean(-1, keepdims=True)
        return (v - mu) / jnp.sqrt(var + eps) * g + b

    for p in params['blocks']:
        h = ln(x, p['ln1_g'][0], p['ln1_b'][0])
        q = h @ p['wq'] + p['bq'][0]
        k = h @ p['wk'] + p['bk'][0]
        v = h @ p['wv'] + p['bv'][0]
        q = q.reshape(B, T, num_heads, D).transpose(0, 2, 1, 3)
        k = k.reshape(B, T, num_heads, D).transpose(0, 2, 1, 3)
        v = v.reshape(B, T, num_heads, D).transpose(0, 2, 1, 3)
        s = jnp.einsum('bhtd,bhsd->bhts', q, k) / (D ** 0.5)
        s = jnp.where(mask == 0, -jnp.inf, s)
        w = jax.nn.softmax(s, axis=-1)
        a = jnp.einsum('bhts,bhsd->bhtd', w, v)
        a = a.transpose(0, 2, 1, 3).reshape(B, T, C)
        x = x + (a @ p['wo'] + p['bo'][0])
        h2 = ln(x, p['ln2_g'][0], p['ln2_b'][0])
        f = jnp.maximum(h2 @ p['w1'] + p['b1'][0], 0.0)
        x = x + (f @ p['w2'] + p['b2'][0])
    x = ln(x, params['lnf_g'][0], params['lnf_b'][0])
    return x @ params['wp'] + params['bp'][0]


# ----------------------------------- main -------------------------------------

if __name__ == "__main__":
    VOCAB = 16
    C = 32          # channel_dim
    CONTEXT = 8     # context_window
    HEADS = 4
    LAYERS = 4
    B, T = 2, 8

    key = jax.random.PRNGKey(0)
    pkey, tkey = jax.random.split(key)
    params = init_params(pkey, VOCAB, C, CONTEXT, LAYERS)
    tokens = jax.random.randint(tkey, (B, T), 0, VOCAB, dtype=jnp.int32)

    prepped = prepare_params(params, HEADS)           # one-time bf16 / layout prep
    logits = transformer_forward(tokens, prepped, HEADS)
    logits = jax.block_until_ready(logits)

    ref = reference_forward(tokens, params, HEADS)
    assert logits.shape == (B, T, VOCAB)
    # bf16 MXU operands + approx reciprocal => looser tolerance than pure f32
    assert jnp.allclose(logits, ref, atol=3e-2, rtol=3e-2), "mismatch vs reference"

    print("KERNEL_OK")
</pallas_src>

<mosaic_0001>
module attributes {stable_mosaic.version = 11 : i64} {
  func.func @fused_layers_kernel(%arg0: i32, %arg1: memref<2x8x32xf32, #tpu.memory_space<vmem>>, %arg2: memref<1x6x32xf32, #tpu.memory_space<vmem>>, %arg3: memref<1x1x96xf32, #tpu.memory_space<vmem>>, %arg4: memref<1x1x128xf32, #tpu.memory_space<vmem>>, %arg5: memref<1x32x96xbf16, #tpu.memory_space<vmem>>, %arg6: memref<1x32x32xbf16, #tpu.memory_space<vmem>>, %arg7: memref<1x32x128xbf16, #tpu.memory_space<vmem>>, %arg8: memref<1x128x32xbf16, #tpu.memory_space<vmem>>, %arg9: memref<2x8x32xf32, #tpu.memory_space<vmem>>, %arg10: memref<2x8x32xf32, #tpu.memory_space<vmem>>, %arg11: memref<8x8xf32, #tpu.memory_space<vmem>>) attributes {dimension_semantics = [#tpu.dimension_semantics<arbitrary>], iteration_bounds = array<i64: 4>, scalar_prefetch = 0 : i64, scratch_operands = 2 : i64, tpu.core_type = #tpu.core_type<tc>, window_params = [{pipeline_mode = #tpu.pipeline_mode<synchronous>, transform_indices = @transform_0, window_bounds = array<i64: 2, 8, 32>}, {transform_indices = @transform_1, window_bounds = array<i64: 1, 6, 32>}, {transform_indices = @transform_2, window_bounds = array<i64: 1, 1, 96>}, {transform_indices = @transform_3, window_bounds = array<i64: 1, 1, 128>}, {transform_indices = @transform_4, window_bounds = array<i64: 1, 32, 96>}, {transform_indices = @transform_5, window_bounds = array<i64: 1, 32, 32>}, {transform_indices = @transform_6, window_bounds = array<i64: 1, 32, 128>}, {transform_indices = @transform_7, window_bounds = array<i64: 1, 128, 32>}, {pipeline_mode = #tpu.pipeline_mode<synchronous>, transform_indices = @transform_8, window_bounds = array<i64: 2, 8, 32>}]} {
    %c0_i32 = arith.constant 0 : i32
    %0 = arith.cmpi eq, %arg0, %c0_i32 : i32
    %1 = arith.extui %0 : i1 to i32
    %c0_i32_0 = arith.constant 0 : i32
    %2 = arith.cmpi ne, %1, %c0_i32_0 : i32
    scf.if %2 {
      %c0_70 = arith.constant 0 : index
      %c0_71 = arith.constant 0 : index
      %c0_72 = arith.constant 0 : index
      %200 = vector.load %arg1[%c0_70, %c0_71, %c0_72] : memref<2x8x32xf32, #tpu.memory_space<vmem>>, vector<2x8x32xf32>
      %c0_73 = arith.constant 0 : index
      %c0_74 = arith.constant 0 : index
      %c0_75 = arith.constant 0 : index
      %201 = vector.load %arg10[%c0_73, %c0_74, %c0_75] : memref<2x8x32xf32, #tpu.memory_space<vmem>>, vector<2x8x32xf32>
      tpu.vector_store %arg10[%c0_73, %c0_74, %c0_75], %200 {strides = array<i32>} : memref<2x8x32xf32, #tpu.memory_space<vmem>>, vector<2x8x32xf32>,
      %202 = tpu.iota {dimensions = array<i32: 0>} : vector<8x8xi32>
      %203 = tpu.iota {dimensions = array<i32: 1>} : vector<8x8xi32>
      %204 = arith.cmpi sle, %203, %202 : vector<8x8xi32>
      %cst_76 = arith.constant 0.000000e+00 : f32
      %cst_77 = arith.constant -1.000000e+30 : f32
      %205 = vector.broadcast %cst_76 : f32 to vector<8x8xf32>
      %206 = vector.broadcast %cst_77 : f32 to vector<8x8xf32>
      %207 = arith.select %204, %205, %206 : vector<8x8xi1>, vector<8x8xf32>
      %c0_78 = arith.constant 0 : index
      %c0_79 = arith.constant 0 : index
      %208 = vector.load %arg11[%c0_78, %c0_79] : memref<8x8xf32, #tpu.memory_space<vmem>>, vector<8x8xf32>
      tpu.vector_store %arg11[%c0_78, %c0_79], %207 {strides = array<i32>} : memref<8x8xf32, #tpu.memory_space<vmem>>, vector<8x8xf32>,
    } else {
    }
    %c0 = arith.constant 0 : index
    %c0_1 = arith.constant 0 : index
    %c0_2 = arith.constant 0 : index
    %3 = vector.load %arg10[%c0, %c0_1, %c0_2] : memref<2x8x32xf32, #tpu.memory_space<vmem>>, vector<2x8x32xf32>
    %c0_3 = arith.constant 0 : index
    %c0_4 = arith.constant 0 : index
    %4 = vector.load %arg11[%c0_3, %c0_4] : memref<8x8xf32, #tpu.memory_space<vmem>>, vector<8x8xf32>
    %c0_5 = arith.constant 0 : index
    %c0_6 = arith.constant 0 : index
    %c0_7 = arith.constant 0 : index
    %5 = vector.load %arg2[%c0_5, %c0_6, %c0_7] : memref<1x6x32xf32, #tpu.memory_space<vmem>>, vector<1x1x32xf32>
    %6 = vector.shape_cast %5 : vector<1x1x32xf32> to vector<32xf32>
    %c0_8 = arith.constant 0 : index
    %c1 = arith.constant 1 : index
    %c0_9 = arith.constant 0 : index
    %7 = vector.load %arg2[%c0_8, %c1, %c0_9] : memref<1x6x32xf32, #tpu.memory_space<vmem>>, vector<1x1x32xf32>
    %8 = vector.shape_cast %7 : vector<1x1x32xf32> to vector<32xf32>
    %c0_10 = arith.constant 0 : index
    %c2 = arith.constant 2 : index
    %c0_11 = arith.constant 0 : index
    %9 = vector.load %arg2[%c0_10, %c2, %c0_11] : memref<1x6x32xf32, #tpu.memory_space<vmem>>, vector<1x1x32xf32>
    %10 = vector.shape_cast %9 : vector<1x1x32xf32> to vector<32xf32>
    %c0_12 = arith.constant 0 : index
    %c3 = arith.constant 3 : index
    %c0_13 = arith.constant 0 : index
    %11 = vector.load %arg2[%c0_12, %c3, %c0_13] : memref<1x6x32xf32, #tpu.memory_space<vmem>>, vector<1x1x32xf32>
    %12 = vector.shape_cast %11 : vector<1x1x32xf32> to vector<32xf32>
    %c0_14 = arith.constant 0 : index
    %c4 = arith.constant 4 : index
    %c0_15 = arith.constant 0 : index
    %13 = vector.load %arg2[%c0_14, %c4, %c0_15] : memref<1x6x32xf32, #tpu.memory_space<vmem>>, vector<1x1x32xf32>
    %14 = vector.shape_cast %13 : vector<1x1x32xf32> to vector<32xf32>
    %c0_16 = arith.constant 0 : index
    %c5 = arith.constant 5 : index
    %c0_17 = arith.constant 0 : index
    %15 = vector.load %arg2[%c0_16, %c5, %c0_17] : memref<1x6x32xf32, #tpu.memory_space<vmem>>, vector<1x1x32xf32>
    %16 = vector.shape_cast %15 : vector<1x1x32xf32> to vector<32xf32>
    %cst = arith.constant dense<0.000000e+00> : vector<2x8xf32>
    %17 = vector.multi_reduction <add>, %3, %cst [2] : vector<2x8x32xf32> to vector<2x8xf32>
    %18 = vector.shape_cast %17 : vector<2x8xf32> to vector<2x8x1xf32>
    %cst_18 = arith.constant 3.200000e+01 : f32
    %19 = vector.broadcast %cst_18 : f32 to vector<2x8x1xf32>
    %20 = arith.divf %18, %19 : vector<2x8x1xf32>
    %21 = vector.broadcast %20 : vector<2x8x1xf32> to vector<2x8x32xf32>
    %22 = arith.subf %3, %21 : vector<2x8x32xf32>
    %23 = arith.mulf %22, %22 : vector<2x8x32xf32>
    %cst_19 = arith.constant dense<0.000000e+00> : vector<2x8xf32>
    %24 = vector.multi_reduction <add>, %23, %cst_19 [2] : vector<2x8x32xf32> to vector<2x8xf32>
    %25 = vector.shape_cast %24 : vector<2x8xf32> to vector<2x8x1xf32>
    %cst_20 = arith.constant 3.200000e+01 : f32
    %26 = vector.broadcast %cst_20 : f32 to vector<2x8x1xf32>
    %27 = arith.divf %25, %26 : vector<2x8x1xf32>
    %28 = vector.broadcast %20 : vector<2x8x1xf32> to vector<2x8x32xf32>
    %29 = arith.subf %3, %28 : vector<2x8x32xf32>
    %cst_21 = arith.constant 9.99999974E-6 : f32
    %30 = vector.broadcast %cst_21 : f32 to vector<2x8x1xf32>
    %31 = arith.addf %27, %30 : vector<2x8x1xf32>
    %32 = math.rsqrt %31 : vector<2x8x1xf32>
    %33 = vector.broadcast %32 : vector<2x8x1xf32> to vector<2x8x32xf32>
    %34 = arith.mulf %29, %33 : vector<2x8x32xf32>
    %35 = vector.shape_cast %6 : vector<32xf32> to vector<1x1x32xf32>
    %36 = vector.broadcast %35 : vector<1x1x32xf32> to vector<2x8x32xf32>
    %37 = arith.mulf %34, %36 : vector<2x8x32xf32>
    %38 = vector.shape_cast %8 : vector<32xf32> to vector<1x1x32xf32>
    %39 = vector.broadcast %38 : vector<1x1x32xf32> to vector<2x8x32xf32>
    %40 = arith.addf %37, %39 : vector<2x8x32xf32>
    %41 = arith.truncf %40 : vector<2x8x32xf32> to vector<2x8x32xbf16>
    %42 = vector.shape_cast %41 : vector<2x8x32xbf16> to vector<16x32xbf16>
    %c0_22 = arith.constant 0 : index
    %c0_23 = arith.constant 0 : index
    %c0_24 = arith.constant 0 : index
    %43 = vector.load %arg5[%c0_22, %c0_23, %c0_24] : memref<1x32x96xbf16, #tpu.memory_space<vmem>>, vector<1x32x96xbf16>
    %44 = vector.shape_cast %43 : vector<1x32x96xbf16> to vector<32x96xbf16>
    %cst_25 = arith.constant dense<0.000000e+00> : vector<16x96xf32>
    %45 = tpu.matmul %42, %44, %cst_25 {dimension_numbers = #tpu.dot_dimension_numbers<[1], [0], [0], [1], [0, 0, 1, 1], [], []>} : vector<16x32xbf16>, vector<32x96xbf16>, vector<16x96xf32> -> vector<16x96xf32>
    %c0_26 = arith.constant 0 : index
    %c0_27 = arith.constant 0 : index
    %c0_28 = arith.constant 0 : index
    %46 = vector.load %arg3[%c0_26, %c0_27, %c0_28] : memref<1x1x96xf32, #tpu.memory_space<vmem>>, vector<1x1x96xf32>
    %47 = vector.shape_cast %46 : vector<1x1x96xf32> to vector<96xf32>
    %48 = vector.shape_cast %47 : vector<96xf32> to vector<1x96xf32>
    %49 = vector.broadcast %48 : vector<1x96xf32> to vector<16x96xf32>
    %50 = arith.addf %45, %49 : vector<16x96xf32>
    %51 = vector.shape_cast %50 : vector<16x96xf32> to vector<2x8x96xf32>
    %52 = vector.extract_strided_slice %51 {offsets = [0, 0, 0], sizes = [2, 8, 8], strides = [1, 1, 1]} : vector<2x8x96xf32> to vector<2x8x8xf32>
    %53 = arith.truncf %52 : vector<2x8x8xf32> to vector<2x8x8xbf16>
    %54 = vector.extract_strided_slice %51 {offsets = [0, 0, 32], sizes = [2, 8, 8], strides = [1, 1, 1]} : vector<2x8x96xf32> to vector<2x8x8xf32>
    %55 = arith.truncf %54 : vector<2x8x8xf32> to vector<2x8x8xbf16>
    %56 = vector.extract_strided_slice %51 {offsets = [0, 0, 64], sizes = [2, 8, 8], strides = [1, 1, 1]} : vector<2x8x96xf32> to vector<2x8x8xf32>
    %57 = arith.truncf %56 : vector<2x8x8xf32> to vector<2x8x8xbf16>
    "tpu.trace_start"() <{level = 10 : i32, message = "btd,bsd->bts"}> : () -> ()
    %cst_29 = arith.constant dense<0.000000e+00> : vector<2x8x8xf32>
    %58 = tpu.matmul %53, %55, %cst_29 {dimension_numbers = #tpu.dot_dimension_numbers<[2], [2], [1], [1], [0, 0, 0, 1, 1, 1], [0], [0]>} : vector<2x8x8xbf16>, vector<2x8x8xbf16>, vector<2x8x8xf32> -> vector<2x8x8xf32>
    "tpu.trace_stop"() : () -> ()
    %59 = vector.shape_cast %4 : vector<8x8xf32> to vector<1x8x8xf32>
    %60 = vector.broadcast %59 : vector<1x8x8xf32> to vector<2x8x8xf32>
    %61 = arith.addf %58, %60 : vector<2x8x8xf32>
    %cst_30 = arith.constant dense<0xFF800000> : vector<2x8xf32>
    %62 = vector.multi_reduction <maximumf>, %61, %cst_30 [2] : vector<2x8x8xf32> to vector<2x8xf32>
    %63 = vector.shape_cast %62 : vector<2x8xf32> to vector<2x8x1xf32>
    %64 = vector.broadcast %63 : vector<2x8x1xf32> to vector<2x8x8xf32>
    %65 = arith.subf %61, %64 : vector<2x8x8xf32>
    %66 = math.exp %65 : vector<2x8x8xf32>
    %cst_31 = arith.constant dense<0.000000e+00> : vector<2x8xf32>
    %67 = vector.multi_reduction <add>, %66, %cst_31 [2] : vector<2x8x8xf32> to vector<2x8xf32>
    %68 = vector.shape_cast %67 : vector<2x8xf32> to vector<2x8x1xf32>
    %69 = tpu.reciprocal %68 {approx = true} : vector<2x8x1xf32> -> vector<2x8x1xf32>
    %70 = vector.broadcast %69 : vector<2x8x1xf32> to vector<2x8x8xf32>
    %71 = arith.mulf %66, %70 : vector<2x8x8xf32>
    %72 = arith.truncf %71 : vector<2x8x8xf32> to vector<2x8x8xbf16>
    "tpu.trace_start"() <{level = 10 : i32, message = "bts,bsd->btd"}> : () -> ()
    %cst_32 = arith.constant dense<0.000000e+00> : vector<2x8x8xf32>
    %73 = tpu.matmul %72, %57, %cst_32 {dimension_numbers = #tpu.dot_dimension_numbers<[2], [1], [1], [2], [0, 0, 0, 1, 1, 2], [0], [0]>} : vector<2x8x8xbf16>, vector<2x8x8xbf16>, vector<2x8x8xf32> -> vector<2x8x8xf32>
    "tpu.trace_stop"() : () -> ()
    %74 = vector.extract_strided_slice %51 {offsets = [0, 0, 8], sizes = [2, 8, 8], strides = [1, 1, 1]} : vector<2x8x96xf32> to vector<2x8x8xf32>
    %75 = arith.truncf %74 : vector<2x8x8xf32> to vector<2x8x8xbf16>
    %76 = vector.extract_strided_slice %51 {offsets = [0, 0, 40], sizes = [2, 8, 8], strides = [1, 1, 1]} : vector<2x8x96xf32> to vector<2x8x8xf32>
    %77 = arith.truncf %76 : vector<2x8x8xf32> to vector<2x8x8xbf16>
    %78 = vector.extract_strided_slice %51 {offsets = [0, 0, 72], sizes = [2, 8, 8], strides = [1, 1, 1]} : vector<2x8x96xf32> to vector<2x8x8xf32>
    %79 = arith.truncf %78 : vector<2x8x8xf32> to vector<2x8x8xbf16>
    "tpu.trace_start"() <{level = 10 : i32, message = "btd,bsd->bts"}> : () -> ()
    %cst_33 = arith.constant dense<0.000000e+00> : vector<2x8x8xf32>
    %80 = tpu.matmul %75, %77, %cst_33 {dimension_numbers = #tpu.dot_dimension_numbers<[2], [2], [1], [1], [0, 0, 0, 1, 1, 1], [0], [0]>} : vector<2x8x8xbf16>, vector<2x8x8xbf16>, vector<2x8x8xf32> -> vector<2x8x8xf32>
    "tpu.trace_stop"() : () -> ()
    %81 = vector.shape_cast %4 : vector<8x8xf32> to vector<1x8x8xf32>
    %82 = vector.broadcast %81 : vector<1x8x8xf32> to vector<2x8x8xf32>
    %83 = arith.addf %80, %82 : vector<2x8x8xf32>
    %cst_34 = arith.constant dense<0xFF800000> : vector<2x8xf32>
    %84 = vector.multi_reduction <maximumf>, %83, %cst_34 [2] : vector<2x8x8xf32> to vector<2x8xf32>
    %85 = vector.shape_cast %84 : vector<2x8xf32> to vector<2x8x1xf32>
    %86 = vector.broadcast %85 : vector<2x8x1xf32> to vector<2x8x8xf32>
    %87 = arith.subf %83, %86 : vector<2x8x8xf32>
    %88 = math.exp %87 : vector<2x8x8xf32>
    %cst_35 = arith.constant dense<0.000000e+00> : vector<2x8xf32>
    %89 = vector.multi_reduction <add>, %88, %cst_35 [2] : vector<2x8x8xf32> to vector<2x8xf32>
    %90 = vector.shape_cast %89 : vector<2x8xf32> to vector<2x8x1xf32>
    %91 = tpu.reciprocal %90 {approx = true} : vector<2x8x1xf32> -> vector<2x8x1xf32>
    %92 = vector.broadcast %91 : vector<2x8x1xf32> to vector<2x8x8xf32>
    %93 = arith.mulf %88, %92 : vector<2x8x8xf32>
    %94 = arith.truncf %93 : vector<2x8x8xf32> to vector<2x8x8xbf16>
    "tpu.trace_start"() <{level = 10 : i32, message = "bts,bsd->btd"}> : () -> ()
    %cst_36 = arith.constant dense<0.000000e+00> : vector<2x8x8xf32>
    %95 = tpu.matmul %94, %79, %cst_36 {dimension_numbers = #tpu.dot_dimension_numbers<[2], [1], [1], [2], [0, 0, 0, 1, 1, 2], [0], [0]>} : vector<2x8x8xbf16>, vector<2x8x8xbf16>, vector<2x8x8xf32> -> vector<2x8x8xf32>
    "tpu.trace_stop"() : () -> ()
    %96 = vector.extract_strided_slice %51 {offsets = [0, 0, 16], sizes = [2, 8, 8], strides = [1, 1, 1]} : vector<2x8x96xf32> to vector<2x8x8xf32>
    %97 = arith.truncf %96 : vector<2x8x8xf32> to vector<2x8x8xbf16>
    %98 = vector.extract_strided_slice %51 {offsets = [0, 0, 48], sizes = [2, 8, 8], strides = [1, 1, 1]} : vector<2x8x96xf32> to vector<2x8x8xf32>
    %99 = arith.truncf %98 : vector<2x8x8xf32> to vector<2x8x8xbf16>
    %100 = vector.extract_strided_slice %51 {offsets = [0, 0, 80], sizes = [2, 8, 8], strides = [1, 1, 1]} : vector<2x8x96xf32> to vector<2x8x8xf32>
    %101 = arith.truncf %100 : vector<2x8x8xf32> to vector<2x8x8xbf16>
    "tpu.trace_start"() <{level = 10 : i32, message = "btd,bsd->bts"}> : () -> ()
    %cst_37 = arith.constant dense<0.000000e+00> : vector<2x8x8xf32>
    %102 = tpu.matmul %97, %99, %cst_37 {dimension_numbers = #tpu.dot_dimension_numbers<[2], [2], [1], [1], [0, 0, 0, 1, 1, 1], [0], [0]>} : vector<2x8x8xbf16>, vector<2x8x8xbf16>, vector<2x8x8xf32> -> vector<2x8x8xf32>
    "tpu.trace_stop"() : () -> ()
    %103 = vector.shape_cast %4 : vector<8x8xf32> to vector<1x8x8xf32>
    %104 = vector.broadcast %103 : vector<1x8x8xf32> to vector<2x8x8xf32>
    %105 = arith.addf %102, %104 : vector<2x8x8xf32>
    %cst_38 = arith.constant dense<0xFF800000> : vector<2x8xf32>
    %106 = vector.multi_reduction <maximumf>, %105, %cst_38 [2] : vector<2x8x8xf32> to vector<2x8xf32>
    %107 = vector.shape_cast %106 : vector<2x8xf32> to vector<2x8x1xf32>
    %108 = vector.broadcast %107 : vector<2x8x1xf32> to vector<2x8x8xf32>
    %109 = arith.subf %105, %108 : vector<2x8x8xf32>
    %110 = math.exp %109 : vector<2x8x8xf32>
    %cst_39 = arith.constant dense<0.000000e+00> : vector<2x8xf32>
    %111 = vector.multi_reduction <add>, %110, %cst_39 [2] : vector<2x8x8xf32> to vector<2x8xf32>
    %112 = vector.shape_cast %111 : vector<2x8xf32> to vector<2x8x1xf32>
    %113 = tpu.reciprocal %112 {approx = true} : vector<2x8x1xf32> -> vector<2x8x1xf32>
    %114 = vector.broadcast %113 : vector<2x8x1xf32> to vector<2x8x8xf32>
    %115 = arith.mulf %110, %114 : vector<2x8x8xf32>
    %116 = arith.truncf %115 : vector<2x8x8xf32> to vector<2x8x8xbf16>
    "tpu.trace_start"() <{level = 10 : i32, message = "bts,bsd->btd"}> : () -> ()
    %cst_40 = arith.constant dense<0.000000e+00> : vector<2x8x8xf32>
    %117 = tpu.matmul %116, %101, %cst_40 {dimension_numbers = #tpu.dot_dimension_numbers<[2], [1], [1], [2], [0, 0, 0, 1, 1, 2], [0], [0]>} : vector<2x8x8xbf16>, vector<2x8x8xbf16>, vector<2x8x8xf32> -> vector<2x8x8xf32>
    "tpu.trace_stop"() : () -> ()
    %118 = vector.extract_strided_slice %51 {offsets = [0, 0, 24], sizes = [2, 8, 8], strides = [1, 1, 1]} : vector<2x8x96xf32> to vector<2x8x8xf32>
    %119 = arith.truncf %118 : vector<2x8x8xf32> to vector<2x8x8xbf16>
    %120 = vector.extract_strided_slice %51 {offsets = [0, 0, 56], sizes = [2, 8, 8], strides = [1, 1, 1]} : vector<2x8x96xf32> to vector<2x8x8xf32>
    %121 = arith.truncf %120 : vector<2x8x8xf32> to vector<2x8x8xbf16>
    %122 = vector.extract_strided_slice %51 {offsets = [0, 0, 88], sizes = [2, 8, 8], strides = [1, 1, 1]} : vector<2x8x96xf32> to vector<2x8x8xf32>
    %123 = arith.truncf %122 : vector<2x8x8xf32> to vector<2x8x8xbf16>
    "tpu.trace_start"() <{level = 10 : i32, message = "btd,bsd->bts"}> : () -> ()
    %cst_41 = arith.constant dense<0.000000e+00> : vector<2x8x8xf32>
    %124 = tpu.matmul %119, %121, %cst_41 {dimension_numbers = #tpu.dot_dimension_numbers<[2], [2], [1], [1], [0, 0, 0, 1, 1, 1], [0], [0]>} : vector<2x8x8xbf16>, vector<2x8x8xbf16>, vector<2x8x8xf32> -> vector<2x8x8xf32>
    "tpu.trace_stop"() : () -> ()
    %125 = vector.shape_cast %4 : vector<8x8xf32> to vector<1x8x8xf32>
    %126 = vector.broadcast %125 : vector<1x8x8xf32> to vector<2x8x8xf32>
    %127 = arith.addf %124, %126 : vector<2x8x8xf32>
    %cst_42 = arith.constant dense<0xFF800000> : vector<2x8xf32>
    %128 = vector.multi_reduction <maximumf>, %127, %cst_42 [2] : vector<2x8x8xf32> to vector<2x8xf32>
    %129 = vector.shape_cast %128 : vector<2x8xf32> to vector<2x8x1xf32>
    %130 = vector.broadcast %129 : vector<2x8x1xf32> to vector<2x8x8xf32>
    %131 = arith.subf %127, %130 : vector<2x8x8xf32>
    %132 = math.exp %131 : vector<2x8x8xf32>
    %cst_43 = arith.constant dense<0.000000e+00> : vector<2x8xf32>
    %133 = vector.multi_reduction <add>, %132, %cst_43 [2] : vector<2x8x8xf32> to vector<2x8xf32>
    %134 = vector.shape_cast %133 : vector<2x8xf32> to vector<2x8x1xf32>
    %135 = tpu.reciprocal %134 {approx = true} : vector<2x8x1xf32> -> vector<2x8x1xf32>
    %136 = vector.broadcast %135 : vector<2x8x1xf32> to vector<2x8x8xf32>
    %137 = arith.mulf %132, %136 : vector<2x8x8xf32>
    %138 = arith.truncf %137 : vector<2x8x8xf32> to vector<2x8x8xbf16>
    "tpu.trace_start"() <{level = 10 : i32, message = "bts,bsd->btd"}> : () -> ()
    %cst_44 = arith.constant dense<0.000000e+00> : vector<2x8x8xf32>
    %139 = tpu.matmul %138, %123, %cst_44 {dimension_numbers = #tpu.dot_dimension_numbers<[2], [1], [1], [2], [0, 0, 0, 1, 1, 2], [0], [0]>} : vector<2x8x8xbf16>, vector<2x8x8xbf16>, vector<2x8x8xf32> -> vector<2x8x8xf32>
    "tpu.trace_stop"() : () -> ()
    %140 = tpu.concatenate %73, %95, %117, %139 in 2 : vector<2x8x8xf32>, vector<2x8x8xf32>, vector<2x8x8xf32>, vector<2x8x8xf32> -> vector<2x8x32xf32>
    %141 = vector.shape_cast %140 : vector<2x8x32xf32> to vector<16x32xf32>
    %142 = arith.truncf %141 : vector<16x32xf32> to vector<16x32xbf16>
    %c0_45 = arith.constant 0 : index
    %c0_46 = arith.constant 0 : index
    %c0_47 = arith.constant 0 : index
    %143 = vector.load %arg6[%c0_45, %c0_46, %c0_47] : memref<1x32x32xbf16, #tpu.memory_space<vmem>>, vector<1x32x32xbf16>
    %144 = vector.shape_cast %143 : vector<1x32x32xbf16> to vector<32x32xbf16>
    %cst_48 = arith.constant dense<0.000000e+00> : vector<16x32xf32>
    %145 = tpu.matmul %142, %144, %cst_48 {dimension_numbers = #tpu.dot_dimension_numbers<[1], [0], [0], [1], [0, 0, 1, 1], [], []>} : vector<16x32xbf16>, vector<32x32xbf16>, vector<16x32xf32> -> vector<16x32xf32>
    %146 = vector.shape_cast %10 : vector<32xf32> to vector<1x32xf32>
    %147 = vector.broadcast %146 : vector<1x32xf32> to vector<16x32xf32>
    %148 = arith.addf %145, %147 : vector<16x32xf32>
    %149 = vector.shape_cast %148 : vector<16x32xf32> to vector<2x8x32xf32>
    %150 = arith.addf %3, %149 : vector<2x8x32xf32>
    %cst_49 = arith.constant dense<0.000000e+00> : vector<2x8xf32>
    %151 = vector.multi_reduction <add>, %150, %cst_49 [2] : vector<2x8x32xf32> to vector<2x8xf32>
    %152 = vector.shape_cast %151 : vector<2x8xf32> to vector<2x8x1xf32>
    %cst_50 = arith.constant 3.200000e+01 : f32
    %153 = vector.broadcast %cst_50 : f32 to vector<2x8x1xf32>
    %154 = arith.divf %152, %153 : vector<2x8x1xf32>
    %155 = vector.broadcast %154 : vector<2x8x1xf32> to vector<2x8x32xf32>
    %156 = arith.subf %150, %155 : vector<2x8x32xf32>
    %157 = arith.mulf %156, %156 : vector<2x8x32xf32>
    %cst_51 = arith.constant dense<0.000000e+00> : vector<2x8xf32>
    %158 = vector.multi_reduction <add>, %157, %cst_51 [2] : vector<2x8x32xf32> to vector<2x8xf32>
    %159 = vector.shape_cast %158 : vector<2x8xf32> to vector<2x8x1xf32>
    %cst_52 = arith.constant 3.200000e+01 : f32
    %160 = vector.broadcast %cst_52 : f32 to vector<2x8x1xf32>
    %161 = arith.divf %159, %160 : vector<2x8x1xf32>
    %162 = vector.broadcast %154 : vector<2x8x1xf32> to vector<2x8x32xf32>
    %163 = arith.subf %150, %162 : vector<2x8x32xf32>
    %cst_53 = arith.constant 9.99999974E-6 : f32
    %164 = vector.broadcast %cst_53 : f32 to vector<2x8x1xf32>
    %165 = arith.addf %161, %164 : vector<2x8x1xf32>
    %166 = math.rsqrt %165 : vector<2x8x1xf32>
    %167 = vector.broadcast %166 : vector<2x8x1xf32> to vector<2x8x32xf32>
    %168 = arith.mulf %163, %167 : vector<2x8x32xf32>
    %169 = vector.shape_cast %12 : vector<32xf32> to vector<1x1x32xf32>
    %170 = vector.broadcast %169 : vector<1x1x32xf32> to vector<2x8x32xf32>
    %171 = arith.mulf %168, %170 : vector<2x8x32xf32>
    %172 = vector.shape_cast %14 : vector<32xf32> to vector<1x1x32xf32>
    %173 = vector.broadcast %172 : vector<1x1x32xf32> to vector<2x8x32xf32>
    %174 = arith.addf %171, %173 : vector<2x8x32xf32>
    %175 = arith.truncf %174 : vector<2x8x32xf32> to vector<2x8x32xbf16>
    %176 = vector.shape_cast %175 : vector<2x8x32xbf16> to vector<16x32xbf16>
    %c0_54 = arith.constant 0 : index
    %c0_55 = arith.constant 0 : index
    %c0_56 = arith.constant 0 : index
    %177 = vector.load %arg7[%c0_54, %c0_55, %c0_56] : memref<1x32x128xbf16, #tpu.memory_space<vmem>>, vector<1x32x128xbf16>
    %178 = vector.shape_cast %177 : vector<1x32x128xbf16> to vector<32x128xbf16>
    %cst_57 = arith.constant dense<0.000000e+00> : vector<16x128xf32>
    %179 = tpu.matmul %176, %178, %cst_57 {dimension_numbers = #tpu.dot_dimension_numbers<[1], [0], [0], [1], [0, 0, 1, 1], [], []>} : vector<16x32xbf16>, vector<32x128xbf16>, vector<16x128xf32> -> vector<16x128xf32>
    %c0_58 = arith.constant 0 : index
    %c0_59 = arith.constant 0 : index
    %c0_60 = arith.constant 0 : index
    %180 = vector.load %arg4[%c0_58, %c0_59, %c0_60] : memref<1x1x128xf32, #tpu.memory_space<vmem>>, vector<1x1x128xf32>
    %181 = vector.shape_cast %180 : vector<1x1x128xf32> to vector<128xf32>
    %182 = vector.shape_cast %181 : vector<128xf32> to vector<1x128xf32>
    %183 = vector.broadcast %182 : vector<1x128xf32> to vector<16x128xf32>
    %184 = arith.addf %179, %183 : vector<16x128xf32>
    %cst_61 = arith.constant 0.000000e+00 : f32
    %185 = vector.broadcast %cst_61 : f32 to vector<16x128xf32>
    %186 = arith.maximumf %184, %185 : vector<16x128xf32>
    %187 = arith.truncf %186 : vector<16x128xf32> to vector<16x128xbf16>
    %c0_62 = arith.constant 0 : index
    %c0_63 = arith.constant 0 : index
    %c0_64 = arith.constant 0 : index
    %188 = vector.load %arg8[%c0_62, %c0_63, %c0_64] : memref<1x128x32xbf16, #tpu.memory_space<vmem>>, vector<1x128x32xbf16>
    %189 = vector.shape_cast %188 : vector<1x128x32xbf16> to vector<128x32xbf16>
    %cst_65 = arith.constant dense<0.000000e+00> : vector<16x32xf32>
    %190 = tpu.matmul %187, %189, %cst_65 {dimension_numbers = #tpu.dot_dimension_numbers<[1], [0], [0], [1], [0, 0, 1, 1], [], []>} : vector<16x128xbf16>, vector<128x32xbf16>, vector<16x32xf32> -> vector<16x32xf32>
    %191 = vector.shape_cast %16 : vector<32xf32> to vector<1x32xf32>
    %192 = vector.broadcast %191 : vector<1x32xf32> to vector<16x32xf32>
    %193 = arith.addf %190, %192 : vector<16x32xf32>
    %194 = vector.shape_cast %193 : vector<16x32xf32> to vector<2x8x32xf32>
    %195 = arith.addf %150, %194 : vector<2x8x32xf32>
    %c0_66 = arith.constant 0 : index
    %c0_67 = arith.constant 0 : index
    %c0_68 = arith.constant 0 : index
    %196 = vector.load %arg10[%c0_66, %c0_67, %c0_68] : memref<2x8x32xf32, #tpu.memory_space<vmem>>, vector<2x8x32xf32>
    tpu.vector_store %arg10[%c0_66, %c0_67, %c0_68], %195 {strides = array<i32>} : memref<2x8x32xf32, #tpu.memory_space<vmem>>, vector<2x8x32xf32>,
    %c3_i32 = arith.constant 3 : i32
    %197 = arith.cmpi eq, %arg0, %c3_i32 : i32
    %198 = arith.extui %197 : i1 to i32
    %c0_i32_69 = arith.constant 0 : i32
    %199 = arith.cmpi ne, %198, %c0_i32_69 : i32
    scf.if %199 {
      %c0_70 = arith.constant 0 : index
      %c0_71 = arith.constant 0 : index
      %c0_72 = arith.constant 0 : index
      %200 = vector.load %arg9[%c0_70, %c0_71, %c0_72] : memref<2x8x32xf32, #tpu.memory_space<vmem>>, vector<2x8x32xf32>
      tpu.vector_store %arg9[%c0_70, %c0_71, %c0_72], %195 {strides = array<i32>} : memref<2x8x32xf32, #tpu.memory_space<vmem>>, vector<2x8x32xf32>,
    } else {
    }
    return
  }
  func.func @transform_0(%arg0: i32) -> (i32, i32, i32) {
    %c0_i32 = arith.constant 0 : i32
    %c0_i32_0 = arith.constant 0 : i32
    %c0_i32_1 = arith.constant 0 : i32
    %c0_i32_2 = arith.constant 0 : i32
    return %c0_i32, %c0_i32_0, %c0_i32_1 : i32, i32, i32
  }
  func.func @transform_1(%arg0: i32) -> (i32, i32, i32) {
    %c0_i32 = arith.constant 0 : i32
    %c0_i32_0 = arith.constant 0 : i32
    %c0_i32_1 = arith.constant 0 : i32
    return %arg0, %c0_i32, %c0_i32_0 : i32, i32, i32
  }
  func.func @transform_2(%arg0: i32) -> (i32, i32, i32) {
    %c0_i32 = arith.constant 0 : i32
    %c0_i32_0 = arith.constant 0 : i32
    %c0_i32_1 = arith.constant 0 : i32
    return %arg0, %c0_i32, %c0_i32_0 : i32, i32, i32
  }
  func.func @transform_3(%arg0: i32) -> (i32, i32, i32) {
    %c0_i32 = arith.constant 0 : i32
    %c0_i32_0 = arith.constant 0 : i32
    %c0_i32_1 = arith.constant 0 : i32
    return %arg0, %c0_i32, %c0_i32_0 : i32, i32, i32
  }
  func.func @transform_4(%arg0: i32) -> (i32, i32, i32) {
    %c0_i32 = arith.constant 0 : i32
    %c0_i32_0 = arith.constant 0 : i32
    %c0_i32_1 = arith.constant 0 : i32
    return %arg0, %c0_i32, %c0_i32_0 : i32, i32, i32
  }
  func.func @transform_5(%arg0: i32) -> (i32, i32, i32) {
    %c0_i32 = arith.constant 0 : i32
    %c0_i32_0 = arith.constant 0 : i32
    %c0_i32_1 = arith.constant 0 : i32
    return %arg0, %c0_i32, %c0_i32_0 : i32, i32, i32
  }
  func.func @transform_6(%arg0: i32) -> (i32, i32, i32) {
    %c0_i32 = arith.constant 0 : i32
    %c0_i32_0 = arith.constant 0 : i32
    %c0_i32_1 = arith.constant 0 : i32
    return %arg0, %c0_i32, %c0_i32_0 : i32, i32, i32
  }
  func.func @transform_7(%arg0: i32) -> (i32, i32, i32) {
    %c0_i32 = arith.constant 0 : i32
    %c0_i32_0 = arith.constant 0 : i32
    %c0_i32_1 = arith.constant 0 : i32
    return %arg0, %c0_i32, %c0_i32_0 : i32, i32, i32
  }
  func.func @transform_8(%arg0: i32) -> (i32, i32, i32) {
    %c0_i32 = arith.constant 0 : i32
    %c0_i32_0 = arith.constant 0 : i32
    %c0_i32_1 = arith.constant 0 : i32
    %c0_i32_2 = arith.constant 0 : i32
    return %c0_i32, %c0_i32_0, %c0_i32_1 : i32, i32, i32
  }
}

</mosaic_0001>

<llo_original>
// kernel: tpu_custom_call.1
$region0: #{tpu_custom_call.1}
  #allocation0 [shape = 'u32[]', space=smem, size = 0x4, offset = 0x4, fixed_abs, tag = 'smem constant byte address 0x4 - core index']
  #allocation1 [shape = 'u32[144,128]{1,0:T(1,128)}', space=vmem, size = 0x12000, scoped, tag = 'internal scratch']
  #allocation2 [shape = 'f32[2,8,32]{2,1,0:T(8,128)}', space=vmem, size = 0x2000, scoped, tag = 'scratch operand']
  #allocation3 [shape = 'f32[8,8]{1,0:T(8,128)}', space=vmem, size = 0x1000, scoped, tag = 'scratch operand']
  %s0 = inlined_call_operand.vmem [shape: f32[2,8,32], index: 0, kind: input, shape index: {}]
  %s1 = inlined_call_operand.vmem [shape: f32[4,6,32], index: 1, kind: input, shape index: {}]
  %s2 = inlined_call_operand.vmem [shape: f32[4,1,96], index: 2, kind: input, shape index: {}]
  %s3 = inlined_call_operand.vmem [shape: f32[4,1,128], index: 3, kind: input, shape index: {}]
  %s4 = inlined_call_operand.vmem [shape: bf16[4,32,96], index: 4, kind: input, shape index: {}]
  %s5 = inlined_call_operand.vmem [shape: bf16[4,32,32], index: 5, kind: input, shape index: {}]
  %s6 = inlined_call_operand.vmem [shape: bf16[4,32,128], index: 6, kind: input, shape index: {}]
  %s7 = inlined_call_operand.vmem [shape: bf16[4,128,32], index: 7, kind: input, shape index: {}]
  %s8 = inlined_call_operand.hbm [shape: f32[2,8,32], index: 8, kind: output, shape index: {}]
  %s9 = sld [smem:[#allocation0]]
  $region73: #{tpu_custom_call.1} parent=0
    _
  %s11 = ssub.s32 1, %s9
  %s12 = scalar_select 0, %s11, %s9
  $region1: #{tpu_custom_call.1} parent=0
    #allocation4 [shape = 'u8[8192]{0}', space=vmem, size = 0x2000, scoped, tag = 'output window, operand 0, single buffered']
    #allocation5 [shape = 's32[2]{0}', space=sflag, size = 0x8, scoped, tag = 'scoped memory for tpu_custom_call.1']
    %13 = vsyncpa [#allocation5], 0
    loop: start=0, step=1, limit=6
    $region2: #{tpu_custom_call.1} parent=1 // loop_pre_header
      _
    $region3: #{tpu_custom_call.1} parent=1 // loop_header
      %s15 = sphi 0, %s19
      %p16 = scmp.ge.s32.totalorder %s15, 6
      %s23 = sphi 0, %s23
      %s25 = sphi 0, %s23
      %s26 = sphi 0, %s25
      %s40 = sphi 0, %s26
      %s46 = sphi 0, %s48
      %s49 = sphi 0, %s46
      %s50 = sphi 0, %s49
      %s66 = sphi 0, %s50
      %s72 = sphi 0, %s74
      %s75 = sphi 0, %s72
      %s76 = sphi 0, %s75
      %s92 = sphi 0, %s76
      %s98 = sphi 0, %s100
      %s101 = sphi 0, %s98
      %s102 = sphi 0, %s101
      %s118 = sphi 0, %s102
      %s124 = sphi 0, %s126
      %s127 = sphi 0, %s124
      %s128 = sphi 0, %s127
      %s144 = sphi 0, %s128
      %s150 = sphi 0, %s152
      %s153 = sphi 0, %s150
      %s154 = sphi 0, %s153
      %s170 = sphi 0, %s154
      %s176 = sphi 0, %s178
      %s179 = sphi 0, %s176
      %s180 = sphi 0, %s179
      %s196 = sphi 0, %s180
      %s202 = sphi 0, %s204
      %s205 = sphi 0, %s202
      %s206 = sphi 0, %s205
      %s222 = sphi 0, %s206
      %s226 = sphi 0, %s226
      %s228 = sphi 0, %s226
      %s229 = sphi 0, %s228
      %s243 = sphi 0, %s229
    $region4: #{tpu_custom_call.1} parent=1 // loop_header_branch
      %18 = sbr.rel (%p16) target = $region8
    $region5: #{tpu_custom_call.1} parent=1 // loop_body
      %s20 = ssub.s32 %s15, 1
      %s21 = ssub.s32 %s15, 2
      %s22 = sadd.s32 %s15, 1
      %s24 = sadd.s32 %s23, 1
      %p27 = scmp.eq.s32.totalorder %s15, 3
      %p28 = scmp.ne.s32.totalorder %s23, %s25
      %p29 = scmp.eq.s32.totalorder %s15, 0
      %p30 = por %p28, %p29
      %p31 = scmp.ne.s32.totalorder %s23, %s25
      %p32 = scmp.eq.s32.totalorder %s20, 3
      %p33 = por %p31, %p32
      %p34 = scmp.ne.s32.totalorder %s25, %s26
      %p35 = scmp.eq.s32.totalorder %s20, 0
      %p36 = por %p34, %p35
      %p37 = scmp.ne.s32.totalorder %s25, %s26
      %p38 = scmp.eq.s32.totalorder %s21, 3
      %p39 = por %p37, %p38
      %p41 = scmp.ne.s32.totalorder %s26, %s40
      %p42 = scmp.eq.s32.totalorder %s21, 0
      %p43 = por %p41, %p42
      %s44 = ssub.s32 %s15, %s22
      %p45 = scmp.eq.s32.totalorder %s44, 0
      %s47 = sadd.s32 %s46, 1
      %s48 = scalar_select %p45, %s46, %s47
      %p51 = pneg %p45
      %p52 = scmp.eq.s32.totalorder %s15, 3
      %p53 = por %p51, %p52
      %p54 = scmp.ne.s32.totalorder %s46, %s49
      %p55 = scmp.eq.s32.totalorder %s15, 0
      %p56 = por %p54, %p55
      %p57 = scmp.ne.s32.totalorder %s46, %s49
      %p58 = scmp.eq.s32.totalorder %s20, 3
      %p59 = por %p57, %p58
      %p60 = scmp.ne.s32.totalorder %s49, %s50
      %p61 = scmp.eq.s32.totalorder %s20, 0
      %p62 = por %p60, %p61
      %p63 = scmp.ne.s32.totalorder %s49, %s50
      %p64 = scmp.eq.s32.totalorder %s21, 3
      %p65 = por %p63, %p64
      %p67 = scmp.ne.s32.totalorder %s50, %s66
      %p68 = scmp.eq.s32.totalorder %s21, 0
      %p69 = por %p67, %p68
      %s70 = ssub.s32 %s15, %s22
      %p71 = scmp.eq.s32.totalorder %s70, 0
      %s73 = sadd.s32 %s72, 1
      %s74 = scalar_select %p71, %s72, %s73
      %p77 = pneg %p71
      %p78 = scmp.eq.s32.totalorder %s15, 3
      %p79 = por %p77, %p78
      %p80 = scmp.ne.s32.totalorder %s72, %s75
      %p81 = scmp.eq.s32.totalorder %s15, 0
      %p82 = por %p80, %p81
      %p83 = scmp.ne.s32.totalorder %s72, %s75
      %p84 = scmp.eq.s32.totalorder %s20, 3
      %p85 = por %p83, %p84
      %p86 = scmp.ne.s32.totalorder %s75, %s76
      %p87 = scmp.eq.s32.totalorder %s20, 0
      %p88 = por %p86, %p87
      %p89 = scmp.ne.s32.totalorder %s75, %s76
      %p90 = scmp.eq.s32.totalorder %s21, 3
      %p91 = por %p89, %p90
      %p93 = scmp.ne.s32.totalorder %s76, %s92
      %p94 = scmp.eq.s32.totalorder %s21, 0
      %p95 = por %p93, %p94
      %s96 = ssub.s32 %s15, %s22
      %p97 = scmp.eq.s32.totalorder %s96, 0
      %s99 = sadd.s32 %s98, 1
      %s100 = scalar_select %p97, %s98, %s99
      %p103 = pneg %p97
      %p104 = scmp.eq.s32.totalorder %s15, 3
      %p105 = por %p103, %p104
      %p106 = scmp.ne.s32.totalorder %s98, %s101
      %p107 = scmp.eq.s32.totalorder %s15, 0
      %p108 = por %p106, %p107
      %p109 = scmp.ne.s32.totalorder %s98, %s101
      %p110 = scmp.eq.s32.totalorder %s20, 3
      %p111 = por %p109, %p110
      %p112 = scmp.ne.s32.totalorder %s101, %s102
      %p113 = scmp.eq.s32.totalorder %s20, 0
      %p114 = por %p112, %p113
      %p115 = scmp.ne.s32.totalorder %s101, %s102
      %p116 = scmp.eq.s32.totalorder %s21, 3
      %p117 = por %p115, %p116
      %p119 = scmp.ne.s32.totalorder %s102, %s118
      %p120 = scmp.eq.s32.totalorder %s21, 0
      %p121 = por %p119, %p120
      %s122 = ssub.s32 %s15, %s22
      %p123 = scmp.eq.s32.totalorder %s122, 0
      %s125 = sadd.s32 %s124, 1
      %s126 = scalar_select %p123, %s124, %s125
      %p129 = pneg %p123
      %p130 = scmp.eq.s32.totalorder %s15, 3
      %p131 = por %p129, %p130
      %p132 = scmp.ne.s32.totalorder %s124, %s127
      %p133 = scmp.eq.s32.totalorder %s15, 0
      %p134 = por %p132, %p133
      %p135 = scmp.ne.s32.totalorder %s124, %s127
      %p136 = scmp.eq.s32.totalorder %s20, 3
      %p137 = por %p135, %p136
      %p138 = scmp.ne.s32.totalorder %s127, %s128
      %p139 = scmp.eq.s32.totalorder %s20, 0
      %p140 = por %p138, %p139
      %p141 = scmp.ne.s32.totalorder %s127, %s128
      %p142 = scmp.eq.s32.totalorder %s21, 3
      %p143 = por %p141, %p142
      %p145 = scmp.ne.s32.totalorder %s128, %s144
      %p146 = scmp.eq.s32.totalorder %s21, 0
      %p147 = por %p145, %p146
      %s148 = ssub.s32 %s15, %s22
      %p149 = scmp.eq.s32.totalorder %s148, 0
      %s151 = sadd.s32 %s150, 1
      %s152 = scalar_select %p149, %s150, %s151
      %p155 = pneg %p149
      %p156 = scmp.eq.s32.totalorder %s15, 3
      %p157 = por %p155, %p156
      %p158 = scmp.ne.s32.totalorder %s150, %s153
      %p159 = scmp.eq.s32.totalorder %s15, 0
      %p160 = por %p158, %p159
      %p161 = scmp.ne.s32.totalorder %s150, %s153
      %p162 = scmp.eq.s32.totalorder %s20, 3
      %p163 = por %p161, %p162
      %p164 = scmp.ne.s32.totalorder %s153, %s154
      %p165 = scmp.eq.s32.totalorder %s20, 0
      %p166 = por %p164, %p165
      %p167 = scmp.ne.s32.totalorder %s153, %s154
      %p168 = scmp.eq.s32.totalorder %s21, 3
      %p169 = por %p167, %p168
      %p171 = scmp.ne.s32.totalorder %s154, %s170
      %p172 = scmp.eq.s32.totalorder %s21, 0
      %p173 = por %p171, %p172
      %s174 = ssub.s32 %s15, %s22
      %p175 = scmp.eq.s32.totalorder %s174, 0
      %s177 = sadd.s32 %s176, 1
      %s178 = scalar_select %p175, %s176, %s177
      %p181 = pneg %p175
      %p182 = scmp.eq.s32.totalorder %s15, 3
      %p183 = por %p181, %p182
      %p184 = scmp.ne.s32.totalorder %s176, %s179
      %p185 = scmp.eq.s32.totalorder %s15, 0
      %p186 = por %p184, %p185
      %p187 = scmp.ne.s32.totalorder %s176, %s179
      %p188 = scmp.eq.s32.totalorder %s20, 3
      %p189 = por %p187, %p188
      %p190 = scmp.ne.s32.totalorder %s179, %s180
      %p191 = scmp.eq.s32.totalorder %s20, 0
      %p192 = por %p190, %p191
      %p193 = scmp.ne.s32.totalorder %s179, %s180
      %p194 = scmp.eq.s32.totalorder %s21, 3
      %p195 = por %p193, %p194
      %p197 = scmp.ne.s32.totalorder %s180, %s196
      %p198 = scmp.eq.s32.totalorder %s21, 0
      %p199 = por %p197, %p198
      %s200 = ssub.s32 %s15, %s22
      %p201 = scmp.eq.s32.totalorder %s200, 0
      %s203 = sadd.s32 %s202, 1
      %s204 = scalar_select %p201, %s202, %s203
      %p207 = pneg %p201
      %p208 = scmp.eq.s32.totalorder %s15, 3
      %p209 = por %p207, %p208
      %p210 = scmp.ne.s32.totalorder %s202, %s205
      %p211 = scmp.eq.s32.totalorder %s15, 0
      %p212 = por %p210, %p211
      %p213 = scmp.ne.s32.totalorder %s202, %s205
      %p214 = scmp.eq.s32.totalorder %s20, 3
      %p215 = por %p213, %p214
      %p216 = scmp.ne.s32.totalorder %s205, %s206
      %p217 = scmp.eq.s32.totalorder %s20, 0
      %p218 = por %p216, %p217
      %p219 = scmp.ne.s32.totalorder %s205, %s206
      %p220 = scmp.eq.s32.totalorder %s21, 3
      %p221 = por %p219, %p220
      %p223 = scmp.ne.s32.totalorder %s206, %s222
      %p224 = scmp.eq.s32.totalorder %s21, 0
      %p225 = por %p223, %p224
      %s227 = sadd.s32 %s226, 1
      %p230 = scmp.eq.s32.totalorder %s15, 3
      %p231 = scmp.ne.s32.totalorder %s226, %s228
      %p232 = scmp.eq.s32.totalorder %s15, 0
      %p233 = por %p231, %p232
      %p234 = scmp.ne.s32.totalorder %s226, %s228
      %p235 = scmp.eq.s32.totalorder %s20, 3
      %p236 = por %p234, %p235
      %p237 = scmp.ne.s32.totalorder %s228, %s229
      %p238 = scmp.eq.s32.totalorder %s20, 0
      %p239 = por %p237, %p238
      %p240 = scmp.ne.s32.totalorder %s228, %s229
      %p241 = scmp.eq.s32.totalorder %s21, 3
      %p242 = por %p240, %p241
      %p244 = scmp.ne.s32.totalorder %s229, %s243
      %p245 = scmp.eq.s32.totalorder %s21, 0
      %p246 = por %p244, %p245
      %p247 = scmp.le.s32.totalorder 1, %s15
      %p248 = scmp.lt.s32.totalorder %s15, 5
      %p249 = pnand %p247, %p248
      %p250 = pneg %p249
      // Predicated region
      $region9: #{tpu_custom_call.1} parent=5 // pred_check
        _
      $region10: #{tpu_custom_call.1} parent=5 // pred_check_branch
        %252 = sbr.rel (%p249) target = $region12
      $region11: #{tpu_custom_call.1} parent=5 // pred_region
        %s253 = ssub.s32 %s15, 1
        // Predicated region
        $region13: #{tpu_custom_call.1} parent=11 // pred_check
          %p254 = pneg %p36
        $region14: #{tpu_custom_call.1} parent=11 // pred_check_branch
          %256 = sbr.rel (%p254) target = $region16
        $region15: #{tpu_custom_call.1} parent=11 // pred_region
          _
        $region16: #{tpu_custom_call.1} parent=11 // pred_fallthru
          _
      $region12: #{tpu_custom_call.1} parent=5 // pred_fallthru
        _
      %p257 = scmp.lt.s32.totalorder %s15, 4
      // Predicated region
      $region17: #{tpu_custom_call.1} parent=5 // pred_check
        %p258 = pneg %p257
      $region18: #{tpu_custom_call.1} parent=5 // pred_check_branch
        %260 = sbr.rel (%p258) target = $region20
      $region19: #{tpu_custom_call.1} parent=5 // pred_region
        // Predicated region
        $region21: #{tpu_custom_call.1} parent=19 // pred_check
          %p261 = pneg %p56
        $region22: #{tpu_custom_call.1} parent=19 // pred_check_branch
          %263 = sbr.rel (%p261) target = $region24
        $region23: #{tpu_custom_call.1} parent=19 // pred_region
          %p264 = scmp.lt.s32.totalorder %s15, 3
          %s265 = scalar_select %p264, %s15, 3
          %s266 = smul.addr %s265, 8
          %s267 = scalar_lea.vmem %s1, %s266
        $region24: #{tpu_custom_call.1} parent=19 // pred_fallthru
          _
        // Predicated region
        $region25: #{tpu_custom_call.1} parent=19 // pred_check
          %p268 = pneg %p82
        $region26: #{tpu_custom_call.1} parent=19 // pred_check_branch
          %270 = sbr.rel (%p268) target = $region28
        $region27: #{tpu_custom_call.1} parent=19 // pred_region
          %p271 = scmp.lt.s32.totalorder %s15, 3
          %s272 = scalar_select %p271, %s15, 3
          %s273 = scalar_lea.vmem %s2, %s272
        $region28: #{tpu_custom_call.1} parent=19 // pred_fallthru
          _
        // Predicated region
        $region29: #{tpu_custom_call.1} parent=19 // pred_check
          %p274 = pneg %p108
        $region30: #{tpu_custom_call.1} parent=19 // pred_check_branch
          %276 = sbr.rel (%p274) target = $region32
        $region31: #{tpu_custom_call.1} parent=19 // pred_region
          %p277 = scmp.lt.s32.totalorder %s15, 3
          %s278 = scalar_select %p277, %s15, 3
          %s279 = scalar_lea.vmem %s3, %s278
        $region32: #{tpu_custom_call.1} parent=19 // pred_fallthru
          _
        // Predicated region
        $region33: #{tpu_custom_call.1} parent=19 // pred_check
          %p280 = pneg %p134
        $region34: #{tpu_custom_call.1} parent=19 // pred_check_branch
          %282 = sbr.rel (%p280) target = $region36
        $region35: #{tpu_custom_call.1} parent=19 // pred_region
          %p283 = scmp.lt.s32.totalorder %s15, 3
          %s284 = scalar_select %p283, %s15, 3
          %s285 = smul.addr %s284, 4
          %s286 = smul.addr %s285, 4
          %s287 = scalar_lea.vmem %s4, %s286
        $region36: #{tpu_custom_call.1} parent=19 // pred_fallthru
          _
        // Predicated region
        $region37: #{tpu_custom_call.1} parent=19 // pred_check
          %p288 = pneg %p160
        $region38: #{tpu_custom_call.1} parent=19 // pred_check_branch
          %290 = sbr.rel (%p288) target = $region40
        $region39: #{tpu_custom_call.1} parent=19 // pred_region
          %p291 = scmp.lt.s32.totalorder %s15, 3
          %s292 = scalar_select %p291, %s15, 3
          %s293 = smul.addr %s292, 4
          %s294 = smul.addr %s293, 4
          %s295 = scalar_lea.vmem %s5, %s294
        $region40: #{tpu_custom_call.1} parent=19 // pred_fallthru
          _
        // Predicated region
        $region41: #{tpu_custom_call.1} parent=19 // pred_check
          %p296 = pneg %p186
        $region42: #{tpu_custom_call.1} parent=19 // pred_check_branch
          %298 = sbr.rel (%p296) target = $region44
        $region43: #{tpu_custom_call.1} parent=19 // pred_region
          %p299 = scmp.lt.s32.totalorder %s15, 3
          %s300 = scalar_select %p299, %s15, 3
          %s301 = smul.addr %s300, 4
          %s302 = smul.addr %s301, 4
          %s303 = scalar_lea.vmem %s6, %s302
        $region44: #{tpu_custom_call.1} parent=19 // pred_fallthru
          _
        // Predicated region
        $region45: #{tpu_custom_call.1} parent=19 // pred_check
          %p304 = pneg %p212
        $region46: #{tpu_custom_call.1} parent=19 // pred_check_branch
          %306 = sbr.rel (%p304) target = $region48
        $region47: #{tpu_custom_call.1} parent=19 // pred_region
          %p307 = scmp.lt.s32.totalorder %s15, 3
          %s308 = scalar_select %p307, %s15, 3
          %s309 = smul.addr %s308, 16
          %s310 = smul.addr %s309, 4
          %s311 = scalar_lea.vmem %s7, %s310
        $region48: #{tpu_custom_call.1} parent=19 // pred_fallthru
          _
      $region20: #{tpu_custom_call.1} parent=5 // pred_fallthru
        _
      %p312 = scmp.le.s32.totalorder 1, %s15
      %p313 = scmp.lt.s32.totalorder %s15, 5
      %p314 = pnand %p312, %p313
      %p315 = pneg %p314
      // Predicated region
      $region49: #{tpu_custom_call.1} parent=5 // pred_check
        _
      $region50: #{tpu_custom_call.1} parent=5 // pred_check_branch
        %317 = sbr.rel (%p314) target = $region52
      $region51: #{tpu_custom_call.1} parent=5 // pred_region
        %s318 = ssub.s32 %s15, 1
        %p319 = pneg %p36
        %p320 = pneg %p33
        %p321 = scmp.lt.s32.totalorder %s20, 3
        %s322 = scalar_select %p321, %s20, 3
        %s323 = smul.addr %s322, 8
        %s324 = scalar_lea.vmem %s1, %s323
        %p325 = pneg %p62
        %p326 = pneg %p59
        %p327 = scmp.lt.s32.totalorder %s20, 3
        %s328 = scalar_select %p327, %s20, 3
        %s329 = scalar_lea.vmem %s2, %s328
        %p330 = pneg %p88
        %p331 = pneg %p85
        %p332 = scmp.lt.s32.totalorder %s20, 3
        %s333 = scalar_select %p332, %s20, 3
        %s334 = scalar_lea.vmem %s3, %s333
        %p335 = pneg %p114
        %p336 = pneg %p111
        %p337 = scmp.lt.s32.totalorder %s20, 3
        %s338 = scalar_select %p337, %s20, 3
        %s339 = smul.addr %s338, 4
        %s340 = smul.addr %s339, 4
        %s341 = scalar_lea.vmem %s4, %s340
        %p342 = pneg %p140
        %p343 = pneg %p137
        %p344 = scmp.lt.s32.totalorder %s20, 3
        %s345 = scalar_select %p344, %s20, 3
        %s346 = smul.addr %s345, 4
        %s347 = smul.addr %s346, 4
        %s348 = scalar_lea.vmem %s5, %s347
        %p349 = pneg %p166
        %p350 = pneg %p163
        %p351 = scmp.lt.s32.totalorder %s20, 3
        %s352 = scalar_select %p351, %s20, 3
        %s353 = smul.addr %s352, 4
        %s354 = smul.addr %s353, 4
        %s355 = scalar_lea.vmem %s6, %s354
        %p356 = pneg %p192
        %p357 = pneg %p189
        %p358 = scmp.lt.s32.totalorder %s20, 3
        %s359 = scalar_select %p358, %s20, 3
        %s360 = smul.addr %s359, 16
        %s361 = smul.addr %s360, 4
        %s362 = scalar_lea.vmem %s7, %s361
        %p363 = pneg %p218
        %p364 = pneg %p215
        %p365 = pneg %p239
        %p366 = pneg %p236
        %p367 = scmp.lt.s32.totalorder %s20, 3
        %s368 = scalar_select %p367, %s20, 3
        %s369 = smul.addr %s368, 8
        %s370 = scalar_lea.vmem %s1, %s369
        %p371 = scmp.lt.s32.totalorder %s20, 3
        %s372 = scalar_select %p371, %s20, 3
        %s373 = scalar_lea.vmem %s2, %s372
        %p374 = scmp.lt.s32.totalorder %s20, 3
        %s375 = scalar_select %p374, %s20, 3
        %s376 = scalar_lea.vmem %s3, %s375
        %p377 = scmp.lt.s32.totalorder %s20, 3
        %s378 = scalar_select %p377, %s20, 3
        %s379 = smul.addr %s378, 4
        %s380 = smul.addr %s379, 4
        %s381 = scalar_lea.vmem %s4, %s380
        %p382 = scmp.lt.s32.totalorder %s20, 3
        %s383 = scalar_select %p382, %s20, 3
        %s384 = smul.addr %s383, 4
        %s385 = smul.addr %s384, 4
        %s386 = scalar_lea.vmem %s5, %s385
        %p387 = scmp.lt.s32.totalorder %s20, 3
        %s388 = scalar_select %p387, %s20, 3
        %s389 = smul.addr %s388, 4
        %s390 = smul.addr %s389, 4
        %s391 = scalar_lea.vmem %s6, %s390
        %p392 = scmp.lt.s32.totalorder %s20, 3
        %s393 = scalar_select %p392, %s20, 3
        %s394 = smul.addr %s393, 16
        %s395 = smul.addr %s394, 4
        %s396 = scalar_lea.vmem %s7, %s395
        %p398 = scmp.eq.s32.totalorder %s20, 0
        // Predicated region
        $region53: #{tpu_custom_call.1} parent=51 // pred_check
          %p399 = pneg %p398
        $region54: #{tpu_custom_call.1} parent=51 // pred_check_branch
          %401 = sbr.rel (%p399) target = $region56
        $region55: #{tpu_custom_call.1} parent=51 // pred_region
          %v402 = vld [vmem:[%s0] sm:$0xff]
          %v403 = vld [vmem:[%s0 + $0x8] sm:$0xff]
          %vm404 = vcmask 261120
          %405 = vst.msk [vmem:[#allocation2] sm:$0xff] %vm404, %v402
          %406 = vst.msk [vmem:[#allocation2 + $0x8] sm:$0xff] %vm404, %v403
          %v407 = vlaneseq
          %v408 = vshrl.u32 %v407, 7
          %v409 = vlaneseq
          %v410 = vand.u32 %v409, 127
          %vm411 = vcmp.le.s32.totalorder %v410, %v408
          %v412 = vsel %vm411, 0.0, -1e+30
          %vm413 = vcmask 64512
          %414 = vst.msk [vmem:[#allocation3] sm:$0xff] %vm413, %v412
        $region56: #{tpu_custom_call.1} parent=51 // pred_fallthru
          _
        %v415 = vld [vmem:[#allocation2] sm:$0xff]
        %v416 = vld [vmem:[#allocation2 + $0x8] sm:$0xff]
        %v417 = vld [vmem:[#allocation3] sm:$0xff]
        %v418 = vld [vmem:[%s370] sm:$0x1]
        %v419 = vld [vmem:[%s370 + $0x1] sm:$0x1]
        %v420 = vld [vmem:[%s370 + $0x2] sm:$0x1]
        %v421 = vld [vmem:[%s370 + $0x3] sm:$0x1]
        %v422 = vld [vmem:[%s370 + $0x4] sm:$0x1]
        %v423 = vld [vmem:[%s370 + $0x5] sm:$0x1]
        %vm424 = vcmask 261120
        %v425 = vsel %vm424, %v415, 0.0
        %426 = vadd.xlane.f32.xlu0 %v425
        %v427 = vpop.xlane.xlu0 %426
        %v428 = vsel %vm424, %v416, 0.0
        %429 = vadd.xlane.f32.xlu0 %v428
        %v430 = vpop.xlane.xlu0 %429
        %v431 = vrcp.pop 32.0
        %v432 = vmul.f32 %v427, %v431
        %v433 = vmul.f32 %v430, %v431
        %v434 = vsub.f32 %v415, %v432
        %v435 = vsub.f32 %v416, %v433
        %v436 = vmul.f32 %v434, %v434
        %v437 = vmul.f32 %v435, %v435
        %v438 = vsel %vm424, %v436, 0.0
        %439 = vadd.xlane.f32.xlu0 %v438
        %v440 = vpop.xlane.xlu0 %439
        %v441 = vsel %vm424, %v437, 0.0
        %442 = vadd.xlane.f32.xlu0 %v441
        %v443 = vpop.xlane.xlu0 %442
        %v444 = vmul.f32 %v440, %v431
        %v445 = vmul.f32 %v443, %v431
        %v446 = vadd.f32 %v444, 1e-05
        %v447 = vadd.f32 %v445, 1e-05
        %v448 = vrsqrt.pop %v446
        %v449 = vrsqrt.pop %v447
        %v450 = vmul.f32 %v434, %v448
        %v451 = vmul.f32 %v435, %v449
        %v452 = vlaneseq
        %v453 = vshrl.u32 %v452, 7
        %v454 = vsub.s32 0, %v453
        %v455 = vrot.slane %v418, %v454
        %v456 = vmul.f32 %v450, %v455
        %v457 = vmul.f32 %v451, %v455
        %v458 = vlaneseq
        %v459 = vshrl.u32 %v458, 7
        %v460 = vsub.s32 0, %v459
        %v461 = vrot.slane %v419, %v460
        %v462 = vadd.f32 %v456, %v461
        %v463 = vadd.f32 %v457, %v461
        %v464 = vpack.c.bf16 %v462, %v462
        %v465 = vpack.c.bf16 %v463, %v463
        %v466 = vld [vmem:[%s381] sm:$0xf]
        %v467 = vld [vmem:[%s381 + $0x4] sm:$0xf]
        %v468 = vld [vmem:[%s381 + $0x8] sm:$0xf]
        %v469 = vld [vmem:[%s381 + $0xc] sm:$0xf]
        %v470 = vld [vmem:[%s373] sm:$0x1]
        %v472 = vlaneseq
        %v473 = vshrl.u32 %v472, 7
        %v474 = vsub.s32 0, %v473
        %v475 = vrot.slane %v470, %v474
        %v479 = vunpack.c.l.b16 %v464
        %v480 = vunpack.c.l.b16 %v465
        %v481 = vpack.c.b16 %v480, %v479
        %v486 = vunpack.c.l.b16 %v466
        %v487 = vunpack.c.l.b16 %v467
        %v488 = vunpack.c.l.b16 %v468
        %v489 = vunpack.c.l.b16 %v469
        %v490 = vpack.c.b16 %v487, %v486
        %v491 = vpack.c.b16 %v489, %v488
        %v495 = vsel %vm424, %v481, 0
        %497 = vmatprep.subr.bf16.mxu0 0
        %498 = vmatpush1.bf16.msra.mxu0 %v490
        %499 = vmatprep.subr.bf16.mxu0 0
        %500 = vmatpush1.bf16.msra.mxu0 %v491
        %501 = vmatprep.subr.bf16.mxu0 0
        %502 = vmatpush1.bf16.msra.mxu0 0
        %503 = vmatprep.subr.bf16.mxu0 0
        %504 = vmatpush1.bf16.msra.mxu0 0
        %505 = vmatprep.subr.bf16.mxu0 0
        %506 = vmatpush1.bf16.msra.mxu0 0
        %507 = vmatprep.subr.bf16.mxu0 0
        %508 = vmatpush1.bf16.msra.mxu0 0
        %509 = vmatprep.subr.bf16.mxu0 0
        %510 = vmatpush1.bf16.msra.mxu0 0
        %511 = vmatprep.subr.bf16.mxu0 0
        %512 = vmatpush1.bf16.msra.mxu0 0
        %513 = vmatprep.subr.bf16.mxu0 0
        %514 = vmatpush1.bf16.msra.mxu0 0
        %515 = vmatprep.subr.bf16.mxu0 0
        %516 = vmatpush1.bf16.msra.mxu0 0
        %517 = vmatprep.subr.bf16.mxu0 0
        %518 = vmatpush1.bf16.msra.mxu0 0
        %519 = vmatprep.subr.bf16.mxu0 0
        %520 = vmatpush1.bf16.msra.mxu0 0
        %521 = vmatprep.subr.bf16.mxu0 0
        %522 = vmatpush1.bf16.msra.mxu0 0
        %523 = vmatprep.subr.bf16.mxu0 0
        %524 = vmatpush1.bf16.msra.mxu0 0
        %525 = vmatprep.subr.bf16.mxu0 0
        %526 = vmatpush1.bf16.msra.mxu0 0
        %527 = vmatprep.subr.bf16.mxu0 0
        %528 = vmatpush1.bf16.msra.mxu0 0
        %529 = vmatprep.mubr.bf16.mxu0 0
        %530 = vmatmul.mubr.bf16.gmra.mrb[0].mxu0 %v495
        %v531 = vpop.f32.mrb[0].mxu0
        %v532 = vadd.f32 %v475, %v531
        %v533 = vpop.f32.mrb[0].mxu0
        %v534 = vpop.f32.mrb[0].mxu0
        %v535 = vadd.f32 %v475, %v534
        %v536 = vpop.f32.mrb[0].mxu0
        %537 = vdwg.mxu0
        %v538 = vpack.c.bf16 %v532, %v532
        %v539 = vpack.c.bf16 %v535, %v535
        %541 = vrot.lane.b32.xlu0 %v538, 96
        %v542 = vpop.permute.xlu0 %541
        %vm543 = vcmask 64512
        %v545 = vsel %vm543, %v538, 0
        %v548 = vsel %vm543, %v542, 0
        %550 = vmatprep.subr.bf16.mxu0 0
        %551 = vmatpush1.bf16.xpose.msra.mxu0 %v548
        %552 = vmatprep.subr.bf16.mxu0 0
        %553 = vmatpush1.bf16.xpose.msra.mxu0 0
        %554 = vmatprep.subr.bf16.mxu0 0
        %555 = vmatpush1.bf16.xpose.msra.mxu0 0
        %556 = vmatprep.subr.bf16.mxu0 0
        %557 = vmatpush1.bf16.xpose.msra.mxu0 0
        %558 = vmatprep.subr.bf16.mxu0 0
        %559 = vmatpush1.bf16.xpose.msra.mxu0 0
        %560 = vmatprep.subr.bf16.mxu0 0
        %561 = vmatpush1.bf16.xpose.msra.mxu0 0
        %562 = vmatprep.subr.bf16.mxu0 0
        %563 = vmatpush1.bf16.xpose.msra.mxu0 0
        %564 = vmatprep.subr.bf16.mxu0 0
        %565 = vmatpush1.bf16.xpose.msra.mxu0 0
        %566 = vmatprep.subr.bf16.mxu0 0
        %567 = vmatpush1.bf16.xpose.msra.mxu0 0
        %568 = vmatprep.subr.bf16.mxu0 0
        %569 = vmatpush1.bf16.xpose.msra.mxu0 0
        %570 = vmatprep.subr.bf16.mxu0 0
        %571 = vmatpush1.bf16.xpose.msra.mxu0 0
        %572 = vmatprep.subr.bf16.mxu0 0
        %573 = vmatpush1.bf16.xpose.msra.mxu0 0
        %574 = vmatprep.subr.bf16.mxu0 0
        %575 = vmatpush1.bf16.xpose.msra.mxu0 0
        %576 = vmatprep.subr.bf16.mxu0 0
        %577 = vmatpush1.bf16.xpose.msra.mxu0 0
        %578 = vmatprep.subr.bf16.mxu0 0
        %579 = vmatpush1.bf16.xpose.msra.mxu0 0
        %580 = vmatprep.subr.bf16.mxu0 0
        %581 = vmatpush1.bf16.xpose.msra.mxu0 0
        %582 = vmatprep.mubr.bf16.mxu0 0
        %583 = vmatmul.mubr.bf16.gmra.mrb[0].mxu0 %v545
        %v584 = vpop.f32.mrb[0].mxu0
        %v585 = vadd.f32 %v417, %v584
        %v586 = vpop.f32.mrb[0].mxu0
        %v587 = vpop.f32.mrb[0].mxu0
        %v588 = vpop.f32.mrb[0].mxu0
        %589 = vdwg.mxu0
        %591 = vrot.lane.b32.xlu0 %v539, 96
        %v592 = vpop.permute.xlu0 %591
        %v594 = vsel %vm543, %v539, 0
        %v597 = vsel %vm543, %v592, 0
        %599 = vmatprep.subr.bf16.mxu0 0
        %600 = vmatpush1.bf16.xpose.msra.mxu0 %v597
        %601 = vmatprep.subr.bf16.mxu0 0
        %602 = vmatpush1.bf16.xpose.msra.mxu0 0
        %603 = vmatprep.subr.bf16.mxu0 0
        %604 = vmatpush1.bf16.xpose.msra.mxu0 0
        %605 = vmatprep.subr.bf16.mxu0 0
        %606 = vmatpush1.bf16.xpose.msra.mxu0 0
        %607 = vmatprep.subr.bf16.mxu0 0
        %608 = vmatpush1.bf16.xpose.msra.mxu0 0
        %609 = vmatprep.subr.bf16.mxu0 0
        %610 = vmatpush1.bf16.xpose.msra.mxu0 0
        %611 = vmatprep.subr.bf16.mxu0 0
        %612 = vmatpush1.bf16.xpose.msra.mxu0 0
        %613 = vmatprep.subr.bf16.mxu0 0
        %614 = vmatpush1.bf16.xpose.msra.mxu0 0
        %615 = vmatprep.subr.bf16.mxu0 0
        %616 = vmatpush1.bf16.xpose.msra.mxu0 0
        %617 = vmatprep.subr.bf16.mxu0 0
        %618 = vmatpush1.bf16.xpose.msra.mxu0 0
        %619 = vmatprep.subr.bf16.mxu0 0
        %620 = vmatpush1.bf16.xpose.msra.mxu0 0
        %621 = vmatprep.subr.bf16.mxu0 0
        %622 = vmatpush1.bf16.xpose.msra.mxu0 0
        %623 = vmatprep.subr.bf16.mxu0 0
        %624 = vmatpush1.bf16.xpose.msra.mxu0 0
        %625 = vmatprep.subr.bf16.mxu0 0
        %626 = vmatpush1.bf16.xpose.msra.mxu0 0
        %627 = vmatprep.subr.bf16.mxu0 0
        %628 = vmatpush1.bf16.xpose.msra.mxu0 0
        %629 = vmatprep.subr.bf16.mxu0 0
        %630 = vmatpush1.bf16.xpose.msra.mxu0 0
        %631 = vmatprep.mubr.bf16.mxu0 0
        %632 = vmatmul.mubr.bf16.gmra.mrb[0].mxu0 %v594
        %v633 = vpop.f32.mrb[0].mxu0
        %v634 = vadd.f32 %v417, %v633
        %v635 = vpop.f32.mrb[0].mxu0
        %v636 = vpop.f32.mrb[0].mxu0
        %v637 = vpop.f32.mrb[0].mxu0
        %638 = vdwg.mxu0
        %v639 = vsel %vm543, %v585, -inf
        %640 = vmax.xlane.f32.xlu0 %v639
        %v641 = vpop.xlane.xlu0 %640
        %v642 = vsel %vm543, %v634, -inf
        %643 = vmax.xlane.f32.xlu0 %v642
        %v644 = vpop.xlane.xlu0 %643
        %v645 = vsub.f32 %v585, %v641
        %v646 = vsub.f32 %v634, %v644
        %v647 = vmul.f32 %v645, 1.442695
        %v648 = vpow.pop %v647
        %v649 = vmul.f32 %v646, 1.442695
        %v650 = vpow.pop %v649
        %v651 = vsel %vm543, %v648, 0.0
        %652 = vadd.xlane.f32.xlu0 %v651
        %v653 = vpop.xlane.xlu0 %652
        %v654 = vsel %vm543, %v650, 0.0
        %655 = vadd.xlane.f32.xlu0 %v654
        %v656 = vpop.xlane.xlu0 %655
        %v657 = vrcp.pop %v653
        %v658 = vrcp.pop %v656
        %v659 = vmul.f32 %v648, %v657
        %v660 = vmul.f32 %v650, %v658
        %v661 = vpack.c.bf16 %v659, %v659
        %v662 = vpack.c.bf16 %v660, %v660
        %663 = vrot.lane.b32.xlu0 %v538, 64
        %v664 = vpop.permute.xlu0 %663
        %v666 = vsel %vm543, %v661, 0
        %vm668 = vcmask 1043456
        %v670 = vsel %vm668, %v664, 0
        %672 = vmatprep.subr.bf16.mxu0 0
        %673 = vmatpush1.bf16.msra.mxu0 %v670
        %674 = vmatprep.subr.bf16.mxu0 0
        %675 = vmatpush1.bf16.msra.mxu0 0
        %676 = vmatprep.subr.bf16.mxu0 0
        %677 = vmatpush1.bf16.msra.mxu0 0
        %678 = vmatprep.subr.bf16.mxu0 0
        %679 = vmatpush1.bf16.msra.mxu0 0
        %680 = vmatprep.subr.bf16.mxu0 0
        %681 = vmatpush1.bf16.msra.mxu0 0
        %682 = vmatprep.subr.bf16.mxu0 0
        %683 = vmatpush1.bf16.msra.mxu0 0
        %684 = vmatprep.subr.bf16.mxu0 0
        %685 = vmatpush1.bf16.msra.mxu0 0
        %686 = vmatprep.subr.bf16.mxu0 0
        %687 = vmatpush1.bf16.msra.mxu0 0
        %688 = vmatprep.subr.bf16.mxu0 0
        %689 = vmatpush1.bf16.msra.mxu0 0
        %690 = vmatprep.subr.bf16.mxu0 0
        %691 = vmatpush1.bf16.msra.mxu0 0
        %692 = vmatprep.subr.bf16.mxu0 0
        %693 = vmatpush1.bf16.msra.mxu0 0
        %694 = vmatprep.subr.bf16.mxu0 0
        %695 = vmatpush1.bf16.msra.mxu0 0
        %696 = vmatprep.subr.bf16.mxu0 0
        %697 = vmatpush1.bf16.msra.mxu0 0
        %698 = vmatprep.subr.bf16.mxu0 0
        %699 = vmatpush1.bf16.msra.mxu0 0
        %700 = vmatprep.subr.bf16.mxu0 0
        %701 = vmatpush1.bf16.msra.mxu0 0
        %702 = vmatprep.subr.bf16.mxu0 0
        %703 = vmatpush1.bf16.msra.mxu0 0
        %704 = vmatprep.mubr.bf16.mxu0 0
        %705 = vmatmul.mubr.bf16.gmra.mrb[0].mxu0 %v666
        %v706 = vpop.f32.mrb[0].mxu0
        %v707 = vadd.f32 0.0, %v706
        %v708 = vpop.f32.mrb[0].mxu0
        %v709 = vpop.f32.mrb[0].mxu0
        %v710 = vpop.f32.mrb[0].mxu0
        %711 = vdwg.mxu0
        %712 = vrot.lane.b32.xlu0 %v539, 64
        %v713 = vpop.permute.xlu0 %712
        %v715 = vsel %vm543, %v662, 0
        %v718 = vsel %vm668, %v713, 0
        %720 = vmatprep.subr.bf16.mxu0 0
        %721 = vmatpush1.bf16.msra.mxu0 %v718
        %722 = vmatprep.subr.bf16.mxu0 0
        %723 = vmatpush1.bf16.msra.mxu0 0
        %724 = vmatprep.subr.bf16.mxu0 0
        %725 = vmatpush1.bf16.msra.mxu0 0
        %726 = vmatprep.subr.bf16.mxu0 0
        %727 = vmatpush1.bf16.msra.mxu0 0
        %728 = vmatprep.subr.bf16.mxu0 0
        %729 = vmatpush1.bf16.msra.mxu0 0
        %730 = vmatprep.subr.bf16.mxu0 0
        %731 = vmatpush1.bf16.msra.mxu0 0
        %732 = vmatprep.subr.bf16.mxu0 0
        %733 = vmatpush1.bf16.msra.mxu0 0
        %734 = vmatprep.subr.bf16.mxu0 0
        %735 = vmatpush1.bf16.msra.mxu0 0
        %736 = vmatprep.subr.bf16.mxu0 0
        %737 = vmatpush1.bf16.msra.mxu0 0
        %738 = vmatprep.subr.bf16.mxu0 0
        %739 = vmatpush1.bf16.msra.mxu0 0
        %740 = vmatprep.subr.bf16.mxu0 0
        %741 = vmatpush1.bf16.msra.mxu0 0
        %742 = vmatprep.subr.bf16.mxu0 0
        %743 = vmatpush1.bf16.msra.mxu0 0
        %744 = vmatprep.subr.bf16.mxu0 0
        %745 = vmatpush1.bf16.msra.mxu0 0
        %746 = vmatprep.subr.bf16.mxu0 0
        %747 = vmatpush1.bf16.msra.mxu0 0
        %748 = vmatprep.subr.bf16.mxu0 0
        %749 = vmatpush1.bf16.msra.mxu0 0
        %750 = vmatprep.subr.bf16.mxu0 0
        %751 = vmatpush1.bf16.msra.mxu0 0
        %752 = vmatprep.mubr.bf16.mxu0 0
        %753 = vmatmul.mubr.bf16.gmra.mrb[0].mxu0 %v715
        %v754 = vpop.f32.mrb[0].mxu0
        %v755 = vadd.f32 0.0, %v754
        %v756 = vpop.f32.mrb[0].mxu0
        %v757 = vpop.f32.mrb[0].mxu0
        %v758 = vpop.f32.mrb[0].mxu0
        %759 = vdwg.mxu0
        %760 = vrot.lane.b32.xlu0 %v538, 120
        %v761 = vpop.permute.xlu0 %760
        %762 = vrot.lane.b32.xlu0 %v538, 88
        %v763 = vpop.permute.xlu0 %762
        %v765 = vsel %vm543, %v761, 0
        %v768 = vsel %vm543, %v763, 0
        %770 = vmatprep.subr.bf16.mxu0 0
        %771 = vmatpush1.bf16.xpose.msra.mxu0 %v768
        %772 = vmatprep.subr.bf16.mxu0 0
        %773 = vmatpush1.bf16.xpose.msra.mxu0 0
        %774 = vmatprep.subr.bf16.mxu0 0
        %775 = vmatpush1.bf16.xpose.msra.mxu0 0
        %776 = vmatprep.subr.bf16.mxu0 0
        %777 = vmatpush1.bf16.xpose.msra.mxu0 0
        %778 = vmatprep.subr.bf16.mxu0 0
        %779 = vmatpush1.bf16.xpose.msra.mxu0 0
        %780 = vmatprep.subr.bf16.mxu0 0
        %781 = vmatpush1.bf16.xpose.msra.mxu0 0
        %782 = vmatprep.subr.bf16.mxu0 0
        %783 = vmatpush1.bf16.xpose.msra.mxu0 0
        %784 = vmatprep.subr.bf16.mxu0 0
        %785 = vmatpush1.bf16.xpose.msra.mxu0 0
        %786 = vmatprep.subr.bf16.mxu0 0
        %787 = vmatpush1.bf16.xpose.msra.mxu0 0
        %788 = vmatprep.subr.bf16.mxu0 0
        %789 = vmatpush1.bf16.xpose.msra.mxu0 0
        %790 = vmatprep.subr.bf16.mxu0 0
        %791 = vmatpush1.bf16.xpose.msra.mxu0 0
        %792 = vmatprep.subr.bf16.mxu0 0
        %793 = vmatpush1.bf16.xpose.msra.mxu0 0
        %794 = vmatprep.subr.bf16.mxu0 0
        %795 = vmatpush1.bf16.xpose.msra.mxu0 0
        %796 = vmatprep.subr.bf16.mxu0 0
        %797 = vmatpush1.bf16.xpose.msra.mxu0 0
        %798 = vmatprep.subr.bf16.mxu0 0
        %799 = vmatpush1.bf16.xpose.msra.mxu0 0
        %800 = vmatprep.subr.bf16.mxu0 0
        %801 = vmatpush1.bf16.xpose.msra.mxu0 0
        %802 = vmatprep.mubr.bf16.mxu0 0
        %803 = vmatmul.mubr.bf16.gmra.mrb[0].mxu0 %v765
        %v804 = vpop.f32.mrb[0].mxu0
        %v805 = vadd.f32 %v417, %v804
        %v806 = vpop.f32.mrb[0].mxu0
        %v807 = vpop.f32.mrb[0].mxu0
        %v808 = vpop.f32.mrb[0].mxu0
        %809 = vdwg.mxu0
        %810 = vrot.lane.b32.xlu0 %v539, 120
        %v811 = vpop.permute.xlu0 %810
        %812 = vrot.lane.b32.xlu0 %v539, 88
        %v813 = vpop.permute.xlu0 %812
        %v815 = vsel %vm543, %v811, 0
        %v818 = vsel %vm543, %v813, 0
        %820 = vmatprep.subr.bf16.mxu0 0
        %821 = vmatpush1.bf16.xpose.msra.mxu0 %v818
        %822 = vmatprep.subr.bf16.mxu0 0
        %823 = vmatpush1.bf16.xpose.msra.mxu0 0
        %824 = vmatprep.subr.bf16.mxu0 0
        %825 = vmatpush1.bf16.xpose.msra.mxu0 0
        %826 = vmatprep.subr.bf16.mxu0 0
        %827 = vmatpush1.bf16.xpose.msra.mxu0 0
        %828 = vmatprep.subr.bf16.mxu0 0
        %829 = vmatpush1.bf16.xpose.msra.mxu0 0
        %830 = vmatprep.subr.bf16.mxu0 0
        %831 = vmatpush1.bf16.xpose.msra.mxu0 0
        %832 = vmatprep.subr.bf16.mxu0 0
        %833 = vmatpush1.bf16.xpose.msra.mxu0 0
        %834 = vmatprep.subr.bf16.mxu0 0
        %835 = vmatpush1.bf16.xpose.msra.mxu0 0
        %836 = vmatprep.subr.bf16.mxu0 0
        %837 = vmatpush1.bf16.xpose.msra.mxu0 0
        %838 = vmatprep.subr.bf16.mxu0 0
        %839 = vmatpush1.bf16.xpose.msra.mxu0 0
        %840 = vmatprep.subr.bf16.mxu0 0
        %841 = vmatpush1.bf16.xpose.msra.mxu0 0
        %842 = vmatprep.subr.bf16.mxu0 0
        %843 = vmatpush1.bf16.xpose.msra.mxu0 0
        %844 = vmatprep.subr.bf16.mxu0 0
        %845 = vmatpush1.bf16.xpose.msra.mxu0 0
        %846 = vmatprep.subr.bf16.mxu0 0
        %847 = vmatpush1.bf16.xpose.msra.mxu0 0
        %848 = vmatprep.subr.bf16.mxu0 0
        %849 = vmatpush1.bf16.xpose.msra.mxu0 0
        %850 = vmatprep.subr.bf16.mxu0 0
        %851 = vmatpush1.bf16.xpose.msra.mxu0 0
        %852 = vmatprep.mubr.bf16.mxu0 0
        %853 = vmatmul.mubr.bf16.gmra.mrb[0].mxu0 %v815
        %v854 = vpop.f32.mrb[0].mxu0
        %v855 = vadd.f32 %v417, %v854
        %v856 = vpop.f32.mrb[0].mxu0
        %v857 = vpop.f32.mrb[0].mxu0
        %v858 = vpop.f32.mrb[0].mxu0
        %859 = vdwg.mxu0
        %v860 = vsel %vm543, %v805, -inf
        %861 = vmax.xlane.f32.xlu0 %v860
        %v862 = vpop.xlane.xlu0 %861
        %v863 = vsel %vm543, %v855, -inf
        %864 = vmax.xlane.f32.xlu0 %v863
        %v865 = vpop.xlane.xlu0 %864
        %v866 = vsub.f32 %v805, %v862
        %v867 = vsub.f32 %v855, %v865
        %v868 = vmul.f32 %v866, 1.442695
        %v869 = vpow.pop %v868
        %v870 = vmul.f32 %v867, 1.442695
        %v871 = vpow.pop %v870
        %v872 = vsel %vm543, %v869, 0.0
        %873 = vadd.xlane.f32.xlu0 %v872
        %v874 = vpop.xlane.xlu0 %873
        %v875 = vsel %vm543, %v871, 0.0
        %876 = vadd.xlane.f32.xlu0 %v875
        %v877 = vpop.xlane.xlu0 %876
        %v878 = vrcp.pop %v874
        %v879 = vrcp.pop %v877
        %v880 = vmul.f32 %v869, %v878
        %v881 = vmul.f32 %v871, %v879
        %v882 = vpack.c.bf16 %v880, %v880
        %v883 = vpack.c.bf16 %v881, %v881
        %884 = vrot.lane.b32.xlu0 %v538, 56
        %v885 = vpop.permute.xlu0 %884
        %v887 = vsel %vm543, %v882, 0
        %v890 = vsel %vm668, %v885, 0
        %892 = vmatprep.subr.bf16.mxu0 0
        %893 = vmatpush1.bf16.msra.mxu0 %v890
        %894 = vmatprep.subr.bf16.mxu0 0
        %895 = vmatpush1.bf16.msra.mxu0 0
        %896 = vmatprep.subr.bf16.mxu0 0
        %897 = vmatpush1.bf16.msra.mxu0 0
        %898 = vmatprep.subr.bf16.mxu0 0
        %899 = vmatpush1.bf16.msra.mxu0 0
        %900 = vmatprep.subr.bf16.mxu0 0
        %901 = vmatpush1.bf16.msra.mxu0 0
        %902 = vmatprep.subr.bf16.mxu0 0
        %903 = vmatpush1.bf16.msra.mxu0 0
        %904 = vmatprep.subr.bf16.mxu0 0
        %905 = vmatpush1.bf16.msra.mxu0 0
        %906 = vmatprep.subr.bf16.mxu0 0
        %907 = vmatpush1.bf16.msra.mxu0 0
        %908 = vmatprep.subr.bf16.mxu0 0
        %909 = vmatpush1.bf16.msra.mxu0 0
        %910 = vmatprep.subr.bf16.mxu0 0
        %911 = vmatpush1.bf16.msra.mxu0 0
        %912 = vmatprep.subr.bf16.mxu0 0
        %913 = vmatpush1.bf16.msra.mxu0 0
        %914 = vmatprep.subr.bf16.mxu0 0
        %915 = vmatpush1.bf16.msra.mxu0 0
        %916 = vmatprep.subr.bf16.mxu0 0
        %917 = vmatpush1.bf16.msra.mxu0 0
        %918 = vmatprep.subr.bf16.mxu0 0
        %919 = vmatpush1.bf16.msra.mxu0 0
        %920 = vmatprep.subr.bf16.mxu0 0
        %921 = vmatpush1.bf16.msra.mxu0 0
        %922 = vmatprep.subr.bf16.mxu0 0
        %923 = vmatpush1.bf16.msra.mxu0 0
        %924 = vmatprep.mubr.bf16.mxu0 0
        %925 = vmatmul.mubr.bf16.gmra.mrb[0].mxu0 %v887
        %v926 = vpop.f32.mrb[0].mxu0
        %v927 = vadd.f32 0.0, %v926
        %v928 = vpop.f32.mrb[0].mxu0
        %v929 = vpop.f32.mrb[0].mxu0
        %v930 = vpop.f32.mrb[0].mxu0
        %931 = vdwg.mxu0
        %932 = vrot.lane.b32.xlu0 %v539, 56
        %v933 = vpop.permute.xlu0 %932
        %v935 = vsel %vm543, %v883, 0
        %v938 = vsel %vm668, %v933, 0
        %940 = vmatprep.subr.bf16.mxu0 0
        %941 = vmatpush1.bf16.msra.mxu0 %v938
        %942 = vmatprep.subr.bf16.mxu0 0
        %943 = vmatpush1.bf16.msra.mxu0 0
        %944 = vmatprep.subr.bf16.mxu0 0
        %945 = vmatpush1.bf16.msra.mxu0 0
        %946 = vmatprep.subr.bf16.mxu0 0
        %947 = vmatpush1.bf16.msra.mxu0 0
        %948 = vmatprep.subr.bf16.mxu0 0
        %949 = vmatpush1.bf16.msra.mxu0 0
        %950 = vmatprep.subr.bf16.mxu0 0
        %951 = vmatpush1.bf16.msra.mxu0 0
        %952 = vmatprep.subr.bf16.mxu0 0
        %953 = vmatpush1.bf16.msra.mxu0 0
        %954 = vmatprep.subr.bf16.mxu0 0
        %955 = vmatpush1.bf16.msra.mxu0 0
        %956 = vmatprep.subr.bf16.mxu0 0
        %957 = vmatpush1.bf16.msra.mxu0 0
        %958 = vmatprep.subr.bf16.mxu0 0
        %959 = vmatpush1.bf16.msra.mxu0 0
        %960 = vmatprep.subr.bf16.mxu0 0
        %961 = vmatpush1.bf16.msra.mxu0 0
        %962 = vmatprep.subr.bf16.mxu0 0
        %963 = vmatpush1.bf16.msra.mxu0 0
        %964 = vmatprep.subr.bf16.mxu0 0
        %965 = vmatpush1.bf16.msra.mxu0 0
        %966 = vmatprep.subr.bf16.mxu0 0
        %967 = vmatpush1.bf16.msra.mxu0 0
        %968 = vmatprep.subr.bf16.mxu0 0
        %969 = vmatpush1.bf16.msra.mxu0 0
        %970 = vmatprep.subr.bf16.mxu0 0
        %971 = vmatpush1.bf16.msra.mxu0 0
        %972 = vmatprep.mubr.bf16.mxu0 0
        %973 = vmatmul.mubr.bf16.gmra.mrb[0].mxu0 %v935
        %v974 = vpop.f32.mrb[0].mxu0
        %v975 = vadd.f32 0.0, %v974
        %v976 = vpop.f32.mrb[0].mxu0
        %v977 = vpop.f32.mrb[0].mxu0
        %v978 = vpop.f32.mrb[0].mxu0
        %979 = vdwg.mxu0
        %980 = vrot.lane.b32.xlu0 %v538, 112
        %v981 = vpop.permute.xlu0 %980
        %982 = vrot.lane.b32.xlu0 %v538, 80
        %v983 = vpop.permute.xlu0 %982
        %v985 = vsel %vm543, %v981, 0
        %v988 = vsel %vm543, %v983, 0
        %990 = vmatprep.subr.bf16.mxu0 0
        %991 = vmatpush1.bf16.xpose.msra.mxu0 %v988
        %992 = vmatprep.subr.bf16.mxu0 0
        %993 = vmatpush1.bf16.xpose.msra.mxu0 0
        %994 = vmatprep.subr.bf16.mxu0 0
        %995 = vmatpush1.bf16.xpose.msra.mxu0 0
        %996 = vmatprep.subr.bf16.mxu0 0
        %997 = vmatpush1.bf16.xpose.msra.mxu0 0
        %998 = vmatprep.subr.bf16.mxu0 0
        %999 = vmatpush1.bf16.xpose.msra.mxu0 0
        %1000 = vmatprep.subr.bf16.mxu0 0
        %1001 = vmatpush1.bf16.xpose.msra.mxu0 0
        %1002 = vmatprep.subr.bf16.mxu0 0
        %1003 = vmatpush1.bf16.xpose.msra.mxu0 0
        %1004 = vmatprep.subr.bf16.mxu0 0
        %1005 = vmatpush1.bf16.xpose.msra.mxu0 0
        %1006 = vmatprep.subr.bf16.mxu0 0
        %1007 = vmatpush1.bf16.xpose.msra.mxu0 0
        %1008 = vmatprep.subr.bf16.mxu0 0
        %1009 = vmatpush1.bf16.xpose.msra.mxu0 0
        %1010 = vmatprep.subr.bf16.mxu0 0
        %1011 = vmatpush1.bf16.xpose.msra.mxu0 0
        %1012 = vmatprep.subr.bf16.mxu0 0
        %1013 = vmatpush1.bf16.xpose.msra.mxu0 0
        %1014 = vmatprep.subr.bf16.mxu0 0
        %1015 = vmatpush1.bf16.xpose.msra.mxu0 0
        %1016 = vmatprep.subr.bf16.mxu0 0
        %1017 = vmatpush1.bf16.xpose.msra.mxu0 0
        %1018 = vmatprep.subr.bf16.mxu0 0
        %1019 = vmatpush1.bf16.xpose.msra.mxu0 0
        %1020 = vmatprep.subr.bf16.mxu0 0
        %1021 = vmatpush1.bf16.xpose.msra.mxu0 0
        %1022 = vmatprep.mubr.bf16.mxu0 0
        %1023 = vmatmul.mubr.bf16.gmra.mrb[0].mxu0 %v985
        %v1024 = vpop.f32.mrb[0].mxu0
        %v1025 = vadd.f32 %v417, %v1024
        %v1026 = vpop.f32.mrb[0].mxu0
        %v1027 = vpop.f32.mrb[0].mxu0
        %v1028 = vpop.f32.mrb[0].mxu0
        %1029 = vdwg.mxu0
        %1030 = vrot.lane.b32.xlu0 %v539, 112
        %v1031 = vpop.permute.xlu0 %1030
        %1032 = vrot.lane.b32.xlu0 %v539, 80
        %v1033 = vpop.permute.xlu0 %1032
        %v1035 = vsel %vm543, %v1031, 0
        %v1038 = vsel %vm543, %v1033, 0
        %1040 = vmatprep.subr.bf16.mxu0 0
        %1041 = vmatpush1.bf16.xpose.msra.mxu0 %v1038
        %1042 = vmatprep.subr.bf16.mxu0 0
        %1043 = vmatpush1.bf16.xpose.msra.mxu0 0
        %1044 = vmatprep.subr.bf16.mxu0 0
        %1045 = vmatpush1.bf16.xpose.msra.mxu0 0
        %1046 = vmatprep.subr.bf16.mxu0 0
        %1047 = vmatpush1.bf16.xpose.msra.mxu0 0
        %1048 = vmatprep.subr.bf16.mxu0 0
        %1049 = vmatpush1.bf16.xpose.msra.mxu0 0
        %1050 = vmatprep.subr.bf16.mxu0 0
        %1051 = vmatpush1.bf16.xpose.msra.mxu0 0
        %1052 = vmatprep.subr.bf16.mxu0 0
        %1053 = vmatpush1.bf16.xpose.msra.mxu0 0
        %1054 = vmatprep.subr.bf16.mxu0 0
        %1055 = vmatpush1.bf16.xpose.msra.mxu0 0
        %1056 = vmatprep.subr.bf16.mxu0 0
        %1057 = vmatpush1.bf16.xpose.msra.mxu0 0
        %1058 = vmatprep.subr.bf16.mxu0 0
        %1059 = vmatpush1.bf16.xpose.msra.mxu0 0
        %1060 = vmatprep.subr.bf16.mxu0 0
        %1061 = vmatpush1.bf16.xpose.msra.mxu0 0
        %1062 = vmatprep.subr.bf16.mxu0 0
        %1063 = vmatpush1.bf16.xpose.msra.mxu0 0
        %1064 = vmatprep.subr.bf16.mxu0 0
        %1065 = vmatpush1.bf16.xpose.msra.mxu0 0
        %1066 = vmatprep.subr.bf16.mxu0 0
        %1067 = vmatpush1.bf16.xpose.msra.mxu0 0
        %1068 = vmatprep.subr.bf16.mxu0 0
        %1069 = vmatpush1.bf16.xpose.msra.mxu0 0
        %1070 = vmatprep.subr.bf16.mxu0 0
        %1071 = vmatpush1.bf16.xpose.msra.mxu0 0
        %1072 = vmatprep.mubr.bf16.mxu0 0
        %1073 = vmatmul.mubr.bf16.gmra.mrb[0].mxu0 %v1035
        %v1074 = vpop.f32.mrb[0].mxu0
        %v1075 = vadd.f32 %v417, %v1074
        %v1076 = vpop.f32.mrb[0].mxu0
        %v1077 = vpop.f32.mrb[0].mxu0
        %v1078 = vpop.f32.mrb[0].mxu0
        %1079 = vdwg.mxu0
        %v1080 = vsel %vm543, %v1025, -inf
        %1081 = vmax.xlane.f32.xlu0 %v1080
        %v1082 = vpop.xlane.xlu0 %1081
        %v1083 = vsel %vm543, %v1075, -inf
        %1084 = vmax.xlane.f32.xlu0 %v1083
        %v1085 = vpop.xlane.xlu0 %1084
        %v1086 = vsub.f32 %v1025, %v1082
        %v1087 = vsub.f32 %v1075, %v1085
        %v1088 = vmul.f32 %v1086, 1.442695
        %v1089 = vpow.pop %v1088
        %v1090 = vmul.f32 %v1087, 1.442695
        %v1091 = vpow.pop %v1090
        %v1092 = vsel %vm543, %v1089, 0.0
        %1093 = vadd.xlane.f32.xlu0 %v1092
        %v1094 = vpop.xlane.xlu0 %1093
        %v1095 = vsel %vm543, %v1091, 0.0
        %1096 = vadd.xlane.f32.xlu0 %v1095
        %v1097 = vpop.xlane.xlu0 %1096
        %v1098 = vrcp.pop %v1094
        %v1099 = vrcp.pop %v1097
        %v1100 = vmul.f32 %v1089, %v1098
        %v1101 = vmul.f32 %v1091, %v1099
        %v1102 = vpack.c.bf16 %v1100, %v1100
        %v1103 = vpack.c.bf16 %v1101, %v1101
        %1104 = vrot.lane.b32.xlu0 %v538, 48
        %v1105 = vpop.permute.xlu0 %1104
        %v1107 = vsel %vm543, %v1102, 0
        %v1110 = vsel %vm668, %v1105, 0
        %1112 = vmatprep.subr.bf16.mxu0 0
        %1113 = vmatpush1.bf16.msra.mxu0 %v1110
        %1114 = vmatprep.subr.bf16.mxu0 0
        %1115 = vmatpush1.bf16.msra.mxu0 0
        %1116 = vmatprep.subr.bf16.mxu0 0
        %1117 = vmatpush1.bf16.msra.mxu0 0
        %1118 = vmatprep.subr.bf16.mxu0 0
        %1119 = vmatpush1.bf16.msra.mxu0 0
        %1120 = vmatprep.subr.bf16.mxu0 0
        %1121 = vmatpush1.bf16.msra.mxu0 0
        %1122 = vmatprep.subr.bf16.mxu0 0
        %1123 = vmatpush1.bf16.msra.mxu0 0
        %1124 = vmatprep.subr.bf16.mxu0 0
        %1125 = vmatpush1.bf16.msra.mxu0 0
        %1126 = vmatprep.subr.bf16.mxu0 0
        %1127 = vmatpush1.bf16.msra.mxu0 0
        %1128 = vmatprep.subr.bf16.mxu0 0
        %1129 = vmatpush1.bf16.msra.mxu0 0
        %1130 = vmatprep.subr.bf16.mxu0 0
        %1131 = vmatpush1.bf16.msra.mxu0 0
        %1132 = vmatprep.subr.bf16.mxu0 0
        %1133 = vmatpush1.bf16.msra.mxu0 0
        %1134 = vmatprep.subr.bf16.mxu0 0
        %1135 = vmatpush1.bf16.msra.mxu0 0
        %1136 = vmatprep.subr.bf16.mxu0 0
        %1137 = vmatpush1.bf16.msra.mxu0 0
        %1138 = vmatprep.subr.bf16.mxu0 0
        %1139 = vmatpush1.bf16.msra.mxu0 0
        %1140 = vmatprep.subr.bf16.mxu0 0
        %1141 = vmatpush1.bf16.msra.mxu0 0
        %1142 = vmatprep.subr.bf16.mxu0 0
        %1143 = vmatpush1.bf16.msra.mxu0 0
        %1144 = vmatprep.mubr.bf16.mxu0 0
        %1145 = vmatmul.mubr.bf16.gmra.mrb[0].mxu0 %v1107
        %v1146 = vpop.f32.mrb[0].mxu0
        %v1147 = vadd.f32 0.0, %v1146
        %v1148 = vpop.f32.mrb[0].mxu0
        %v1149 = vpop.f32.mrb[0].mxu0
        %v1150 = vpop.f32.mrb[0].mxu0
        %1151 = vdwg.mxu0
        %1152 = vrot.lane.b32.xlu0 %v539, 48
        %v1153 = vpop.permute.xlu0 %1152
        %v1155 = vsel %vm543, %v1103, 0
        %v1158 = vsel %vm668, %v1153, 0
        %1160 = vmatprep.subr.bf16.mxu0 0
        %1161 = vmatpush1.bf16.msra.mxu0 %v1158
        %1162 = vmatprep.subr.bf16.mxu0 0
        %1163 = vmatpush1.bf16.msra.mxu0 0
        %1164 = vmatprep.subr.bf16.mxu0 0
        %1165 = vmatpush1.bf16.msra.mxu0 0
        %1166 = vmatprep.subr.bf16.mxu0 0
        %1167 = vmatpush1.bf16.msra.mxu0 0
        %1168 = vmatprep.subr.bf16.mxu0 0
        %1169 = vmatpush1.bf16.msra.mxu0 0
        %1170 = vmatprep.subr.bf16.mxu0 0
        %1171 = vmatpush1.bf16.msra.mxu0 0
        %1172 = vmatprep.subr.bf16.mxu0 0
        %1173 = vmatpush1.bf16.msra.mxu0 0
        %1174 = vmatprep.subr.bf16.mxu0 0
        %1175 = vmatpush1.bf16.msra.mxu0 0
        %1176 = vmatprep.subr.bf16.mxu0 0
        %1177 = vmatpush1.bf16.msra.mxu0 0
        %1178 = vmatprep.subr.bf16.mxu0 0
        %1179 = vmatpush1.bf16.msra.mxu0 0
        %1180 = vmatprep.subr.bf16.mxu0 0
        %1181 = vmatpush1.bf16.msra.mxu0 0
        %1182 = vmatprep.subr.bf16.mxu0 0
        %1183 = vmatpush1.bf16.msra.mxu0 0
        %1184 = vmatprep.subr.bf16.mxu0 0
        %1185 = vmatpush1.bf16.msra.mxu0 0
        %1186 = vmatprep.subr.bf16.mxu0 0
        %1187 = vmatpush1.bf16.msra.mxu0 0
        %1188 = vmatprep.subr.bf16.mxu0 0
        %1189 = vmatpush1.bf16.msra.mxu0 0
        %1190 = vmatprep.subr.bf16.mxu0 0
        %1191 = vmatpush1.bf16.msra.mxu0 0
        %1192 = vmatprep.mubr.bf16.mxu0 0
        %1193 = vmatmul.mubr.bf16.gmra.mrb[0].mxu0 %v1155
        %v1194 = vpop.f32.mrb[0].mxu0
        %v1195 = vadd.f32 0.0, %v1194
        %v1196 = vpop.f32.mrb[0].mxu0
        %v1197 = vpop.f32.mrb[0].mxu0
        %v1198 = vpop.f32.mrb[0].mxu0
        %1199 = vdwg.mxu0
        %1200 = vrot.lane.b32.xlu0 %v538, 104
        %v1201 = vpop.permute.xlu0 %1200
        %1202 = vrot.lane.b32.xlu0 %v538, 72
        %v1203 = vpop.permute.xlu0 %1202
        %v1205 = vsel %vm543, %v1201, 0
        %v1208 = vsel %vm543, %v1203, 0
        %1210 = vmatprep.subr.bf16.mxu0 0
        %1211 = vmatpush1.bf16.xpose.msra.mxu0 %v1208
        %1212 = vmatprep.subr.bf16.mxu0 0
        %1213 = vmatpush1.bf16.xpose.msra.mxu0 0
        %1214 = vmatprep.subr.bf16.mxu0 0
        %1215 = vmatpush1.bf16.xpose.msra.mxu0 0
        %1216 = vmatprep.subr.bf16.mxu0 0
        %1217 = vmatpush1.bf16.xpose.msra.mxu0 0
        %1218 = vmatprep.subr.bf16.mxu0 0
        %1219 = vmatpush1.bf16.xpose.msra.mxu0 0
        %1220 = vmatprep.subr.bf16.mxu0 0
        %1221 = vmatpush1.bf16.xpose.msra.mxu0 0
        %1222 = vmatprep.subr.bf16.mxu0 0
        %1223 = vmatpush1.bf16.xpose.msra.mxu0 0
        %1224 = vmatprep.subr.bf16.mxu0 0
        %1225 = vmatpush1.bf16.xpose.msra.mxu0 0
        %1226 = vmatprep.subr.bf16.mxu0 0
        %1227 = vmatpush1.bf16.xpose.msra.mxu0 0
        %1228 = vmatprep.subr.bf16.mxu0 0
        %1229 = vmatpush1.bf16.xpose.msra.mxu0 0
        %1230 = vmatprep.subr.bf16.mxu0 0
        %1231 = vmatpush1.bf16.xpose.msra.mxu0 0
        %1232 = vmatprep.subr.bf16.mxu0 0
        %1233 = vmatpush1.bf16.xpose.msra.mxu0 0
        %1234 = vmatprep.subr.bf16.mxu0 0
        %1235 = vmatpush1.bf16.xpose.msra.mxu0 0
        %1236 = vmatprep.subr.bf16.mxu0 0
        %1237 = vmatpush1.bf16.xpose.msra.mxu0 0
        %1238 = vmatprep.subr.bf16.mxu0 0
        %1239 = vmatpush1.bf16.xpose.msra.mxu0 0
        %1240 = vmatprep.subr.bf16.mxu0 0
        %1241 = vmatpush1.bf16.xpose.msra.mxu0 0
        %1242 = vmatprep.mubr.bf16.mxu0 0
        %1243 = vmatmul.mubr.bf16.gmra.mrb[0].mxu0 %v1205
        %v1244 = vpop.f32.mrb[0].mxu0
        %v1245 = vadd.f32 %v417, %v1244
        %v1246 = vpop.f32.mrb[0].mxu0
        %v1247 = vpop.f32.mrb[0].mxu0
        %v1248 = vpop.f32.mrb[0].mxu0
        %1249 = vdwg.mxu0
        %1250 = vrot.lane.b32.xlu0 %v539, 104
        %v1251 = vpop.permute.xlu0 %1250
        %1252 = vrot.lane.b32.xlu0 %v539, 72
        %v1253 = vpop.permute.xlu0 %1252
        %v1255 = vsel %vm543, %v1251, 0
        %v1258 = vsel %vm543, %v1253, 0
        %1260 = vmatprep.subr.bf16.mxu0 0
        %1261 = vmatpush1.bf16.xpose.msra.mxu0 %v1258
        %1262 = vmatprep.subr.bf16.mxu0 0
        %1263 = vmatpush1.bf16.xpose.msra.mxu0 0
        %1264 = vmatprep.subr.bf16.mxu0 0
        %1265 = vmatpush1.bf16.xpose.msra.mxu0 0
        %1266 = vmatprep.subr.bf16.mxu0 0
        %1267 = vmatpush1.bf16.xpose.msra.mxu0 0
        %1268 = vmatprep.subr.bf16.mxu0 0
        %1269 = vmatpush1.bf16.xpose.msra.mxu0 0
        %1270 = vmatprep.subr.bf16.mxu0 0
        %1271 = vmatpush1.bf16.xpose.msra.mxu0 0
        %1272 = vmatprep.subr.bf16.mxu0 0
        %1273 = vmatpush1.bf16.xpose.msra.mxu0 0
        %1274 = vmatprep.subr.bf16.mxu0 0
        %1275 = vmatpush1.bf16.xpose.msra.mxu0 0
        %1276 = vmatprep.subr.bf16.mxu0 0
        %1277 = vmatpush1.bf16.xpose.msra.mxu0 0
        %1278 = vmatprep.subr.bf16.mxu0 0
        %1279 = vmatpush1.bf16.xpose.msra.mxu0 0
        %1280 = vmatprep.subr.bf16.mxu0 0
        %1281 = vmatpush1.bf16.xpose.msra.mxu0 0
        %1282 = vmatprep.subr.bf16.mxu0 0
        %1283 = vmatpush1.bf16.xpose.msra.mxu0 0
        %1284 = vmatprep.subr.bf16.mxu0 0
        %1285 = vmatpush1.bf16.xpose.msra.mxu0 0
        %1286 = vmatprep.subr.bf16.mxu0 0
        %1287 = vmatpush1.bf16.xpose.msra.mxu0 0
        %1288 = vmatprep.subr.bf16.mxu0 0
        %1289 = vmatpush1.bf16.xpose.msra.mxu0 0
        %1290 = vmatprep.subr.bf16.mxu0 0
        %1291 = vmatpush1.bf16.xpose.msra.mxu0 0
        %1292 = vmatprep.mubr.bf16.mxu0 0
        %1293 = vmatmul.mubr.bf16.gmra.mrb[0].mxu0 %v1255
        %v1294 = vpop.f32.mrb[0].mxu0
        %v1295 = vadd.f32 %v417, %v1294
        %v1296 = vpop.f32.mrb[0].mxu0
        %v1297 = vpop.f32.mrb[0].mxu0
        %v1298 = vpop.f32.mrb[0].mxu0
        %1299 = vdwg.mxu0
        %v1300 = vsel %vm543, %v1245, -inf
        %1301 = vmax.xlane.f32.xlu0 %v1300
        %v1302 = vpop.xlane.xlu0 %1301
        %v1303 = vsel %vm543, %v1295, -inf
        %1304 = vmax.xlane.f32.xlu0 %v1303
        %v1305 = vpop.xlane.xlu0 %1304
        %v1306 = vsub.f32 %v1245, %v1302
        %v1307 = vsub.f32 %v1295, %v1305
        %v1308 = vmul.f32 %v1306, 1.442695
        %v1309 = vpow.pop %v1308
        %v1310 = vmul.f32 %v1307, 1.442695
        %v1311 = vpow.pop %v1310
        %v1312 = vsel %vm543, %v1309, 0.0
        %1313 = vadd.xlane.f32.xlu0 %v1312
        %v1314 = vpop.xlane.xlu0 %1313
        %v1315 = vsel %vm543, %v1311, 0.0
        %1316 = vadd.xlane.f32.xlu0 %v1315
        %v1317 = vpop.xlane.xlu0 %1316
        %v1318 = vrcp.pop %v1314
        %v1319 = vrcp.pop %v1317
        %v1320 = vmul.f32 %v1309, %v1318
        %v1321 = vmul.f32 %v1311, %v1319
        %v1322 = vpack.c.bf16 %v1320, %v1320
        %v1323 = vpack.c.bf16 %v1321, %v1321
        %1324 = vrot.lane.b32.xlu0 %v538, 40
        %v1325 = vpop.permute.xlu0 %1324
        %v1327 = vsel %vm543, %v1322, 0
        %v1330 = vsel %vm668, %v1325, 0
        %1332 = vmatprep.subr.bf16.mxu0 0
        %1333 = vmatpush1.bf16.msra.mxu0 %v1330
        %1334 = vmatprep.subr.bf16.mxu0 0
        %1335 = vmatpush1.bf16.msra.mxu0 0
        %1336 = vmatprep.subr.bf16.mxu0 0
        %1337 = vmatpush1.bf16.msra.mxu0 0
        %1338 = vmatprep.subr.bf16.mxu0 0
        %1339 = vmatpush1.bf16.msra.mxu0 0
        %1340 = vmatprep.subr.bf16.mxu0 0
        %1341 = vmatpush1.bf16.msra.mxu0 0
        %1342 = vmatprep.subr.bf16.mxu0 0
        %1343 = vmatpush1.bf16.msra.mxu0 0
        %1344 = vmatprep.subr.bf16.mxu0 0
        %1345 = vmatpush1.bf16.msra.mxu0 0
        %1346 = vmatprep.subr.bf16.mxu0 0
        %1347 = vmatpush1.bf16.msra.mxu0 0
        %1348 = vmatprep.subr.bf16.mxu0 0
        %1349 = vmatpush1.bf16.msra.mxu0 0
        %1350 = vmatprep.subr.bf16.mxu0 0
        %1351 = vmatpush1.bf16.msra.mxu0 0
        %1352 = vmatprep.subr.bf16.mxu0 0
        %1353 = vmatpush1.bf16.msra.mxu0 0
        %1354 = vmatprep.subr.bf16.mxu0 0
        %1355 = vmatpush1.bf16.msra.mxu0 0
        %1356 = vmatprep.subr.bf16.mxu0 0
        %1357 = vmatpush1.bf16.msra.mxu0 0
        %1358 = vmatprep.subr.bf16.mxu0 0
        %1359 = vmatpush1.bf16.msra.mxu0 0
        %1360 = vmatprep.subr.bf16.mxu0 0
        %1361 = vmatpush1.bf16.msra.mxu0 0
        %1362 = vmatprep.subr.bf16.mxu0 0
        %1363 = vmatpush1.bf16.msra.mxu0 0
        %1364 = vmatprep.mubr.bf16.mxu0 0
        %1365 = vmatmul.mubr.bf16.gmra.mrb[0].mxu0 %v1327
        %v1366 = vpop.f32.mrb[0].mxu0
        %v1367 = vadd.f32 0.0, %v1366
        %v1368 = vpop.f32.mrb[0].mxu0
        %v1369 = vpop.f32.mrb[0].mxu0
        %v1370 = vpop.f32.mrb[0].mxu0
        %1371 = vdwg.mxu0
        %1372 = vrot.lane.b32.xlu0 %v539, 40
        %v1373 = vpop.permute.xlu0 %1372
        %v1375 = vsel %vm543, %v1323, 0
        %v1378 = vsel %vm668, %v1373, 0
        %1380 = vmatprep.subr.bf16.mxu0 0
        %1381 = vmatpush1.bf16.msra.mxu0 %v1378
        %1382 = vmatprep.subr.bf16.mxu0 0
        %1383 = vmatpush1.bf16.msra.mxu0 0
        %1384 = vmatprep.subr.bf16.mxu0 0
        %1385 = vmatpush1.bf16.msra.mxu0 0
        %1386 = vmatprep.subr.bf16.mxu0 0
        %1387 = vmatpush1.bf16.msra.mxu0 0
        %1388 = vmatprep.subr.bf16.mxu0 0
        %1389 = vmatpush1.bf16.msra.mxu0 0
        %1390 = vmatprep.subr.bf16.mxu0 0
        %1391 = vmatpush1.bf16.msra.mxu0 0
        %1392 = vmatprep.subr.bf16.mxu0 0
        %1393 = vmatpush1.bf16.msra.mxu0 0
        %1394 = vmatprep.subr.bf16.mxu0 0
        %1395 = vmatpush1.bf16.msra.mxu0 0
        %1396 = vmatprep.subr.bf16.mxu0 0
        %1397 = vmatpush1.bf16.msra.mxu0 0
        %1398 = vmatprep.subr.bf16.mxu0 0
        %1399 = vmatpush1.bf16.msra.mxu0 0
        %1400 = vmatprep.subr.bf16.mxu0 0
        %1401 = vmatpush1.bf16.msra.mxu0 0
        %1402 = vmatprep.subr.bf16.mxu0 0
        %1403 = vmatpush1.bf16.msra.mxu0 0
        %1404 = vmatprep.subr.bf16.mxu0 0
        %1405 = vmatpush1.bf16.msra.mxu0 0
        %1406 = vmatprep.subr.bf16.mxu0 0
        %1407 = vmatpush1.bf16.msra.mxu0 0
        %1408 = vmatprep.subr.bf16.mxu0 0
        %1409 = vmatpush1.bf16.msra.mxu0 0
        %1410 = vmatprep.subr.bf16.mxu0 0
        %1411 = vmatpush1.bf16.msra.mxu0 0
        %1412 = vmatprep.mubr.bf16.mxu0 0
        %1413 = vmatmul.mubr.bf16.gmra.mrb[0].mxu0 %v1375
        %v1414 = vpop.f32.mrb[0].mxu0
        %v1415 = vadd.f32 0.0, %v1414
        %v1416 = vpop.f32.mrb[0].mxu0
        %v1417 = vpop.f32.mrb[0].mxu0
        %v1418 = vpop.f32.mrb[0].mxu0
        %1419 = vdwg.mxu0
        %1422 = vrot.lane.b32.xlu0 %v927, 8
        %v1423 = vpop.permute.xlu0 %1422
        %1424 = vrot.lane.b32.xlu0 %v975, 8
        %v1425 = vpop.permute.xlu0 %1424
        %1430 = vrot.lane.b32.xlu0 %v1147, 16
        %v1431 = vpop.permute.xlu0 %1430
        %1432 = vrot.lane.b32.xlu0 %v1195, 16
        %v1433 = vpop.permute.xlu0 %1432
        %1438 = vrot.lane.b32.xlu0 %v1367, 24
        %v1439 = vpop.permute.xlu0 %1438
        %1440 = vrot.lane.b32.xlu0 %v1415, 24
        %v1441 = vpop.permute.xlu0 %1440
        %v1444 = vsel %vm543, %v707, %v1423
        %v1445 = vsel %vm543, %v755, %v1425
        %vm1446 = vcmask 130048
        %v1447 = vsel %vm1446, %v1444, %v1431
        %v1448 = vsel %vm1446, %v1445, %v1433
        %vm1449 = vcmask 195584
        %v1450 = vsel %vm1449, %v1447, %v1439
        %v1451 = vsel %vm1449, %v1448, %v1441
        %v1452 = vpack.c.bf16 %v1451, %v1450
        %v1453 = vld [vmem:[%s386] sm:$0xf]
        %v1454 = vld [vmem:[%s386 + $0x4] sm:$0xf]
        %v1455 = vld [vmem:[%s386 + $0x8] sm:$0xf]
        %v1456 = vld [vmem:[%s386 + $0xc] sm:$0xf]
        %v1457 = vlaneseq
        %v1458 = vshrl.u32 %v1457, 7
        %v1459 = vsub.s32 0, %v1458
        %v1460 = vrot.slane %v420, %v1459
        %v1465 = vunpack.c.l.b16 %v1453
        %v1466 = vunpack.c.l.b16 %v1454
        %v1467 = vunpack.c.l.b16 %v1455
        %v1468 = vunpack.c.l.b16 %v1456
        %v1469 = vpack.c.b16 %v1466, %v1465
        %v1470 = vpack.c.b16 %v1468, %v1467
        %v1474 = vsel %vm424, %v1452, 0
        %1476 = vmatprep.subr.bf16.mxu0 0
        %1477 = vmatpush1.bf16.msra.mxu0 %v1469
        %1478 = vmatprep.subr.bf16.mxu0 0
        %1479 = vmatpush1.bf16.msra.mxu0 %v1470
        %1480 = vmatprep.subr.bf16.mxu0 0
        %1481 = vmatpush1.bf16.msra.mxu0 0
        %1482 = vmatprep.subr.bf16.mxu0 0
        %1483 = vmatpush1.bf16.msra.mxu0 0
        %1484 = vmatprep.subr.bf16.mxu0 0
        %1485 = vmatpush1.bf16.msra.mxu0 0
        %1486 = vmatprep.subr.bf16.mxu0 0
        %1487 = vmatpush1.bf16.msra.mxu0 0
        %1488 = vmatprep.subr.bf16.mxu0 0
        %1489 = vmatpush1.bf16.msra.mxu0 0
        %1490 = vmatprep.subr.bf16.mxu0 0
        %1491 = vmatpush1.bf16.msra.mxu0 0
        %1492 = vmatprep.subr.bf16.mxu0 0
        %1493 = vmatpush1.bf16.msra.mxu0 0
        %1494 = vmatprep.subr.bf16.mxu0 0
        %1495 = vmatpush1.bf16.msra.mxu0 0
        %1496 = vmatprep.subr.bf16.mxu0 0
        %1497 = vmatpush1.bf16.msra.mxu0 0
        %1498 = vmatprep.subr.bf16.mxu0 0
        %1499 = vmatpush1.bf16.msra.mxu0 0
        %1500 = vmatprep.subr.bf16.mxu0 0
        %1501 = vmatpush1.bf16.msra.mxu0 0
        %1502 = vmatprep.subr.bf16.mxu0 0
        %1503 = vmatpush1.bf16.msra.mxu0 0
        %1504 = vmatprep.subr.bf16.mxu0 0
        %1505 = vmatpush1.bf16.msra.mxu0 0
        %1506 = vmatprep.subr.bf16.mxu0 0
        %1507 = vmatpush1.bf16.msra.mxu0 0
        %1508 = vmatprep.mubr.bf16.mxu0 0
        %1509 = vmatmul.mubr.bf16.gmra.mrb[0].mxu0 %v1474
        %v1510 = vpop.f32.mrb[0].mxu0
        %v1511 = vadd.f32 %v1460, %v1510
        %v1512 = vpop.f32.mrb[0].mxu0
        %v1513 = vpop.f32.mrb[0].mxu0
        %v1514 = vadd.f32 %v1460, %v1513
        %v1515 = vpop.f32.mrb[0].mxu0
        %1516 = vdwg.mxu0
        %v1517 = vadd.f32 %v415, %v1511
        %v1518 = vadd.f32 %v416, %v1514
        %v1519 = vsel %vm424, %v1517, 0.0
        %1520 = vadd.xlane.f32.xlu0 %v1519
        %v1521 = vpop.xlane.xlu0 %1520
        %v1522 = vsel %vm424, %v1518, 0.0
        %1523 = vadd.xlane.f32.xlu0 %v1522
        %v1524 = vpop.xlane.xlu0 %1523
        %v1525 = vmul.f32 %v1521, %v431
        %v1526 = vmul.f32 %v1524, %v431
        %v1527 = vsub.f32 %v1517, %v1525
        %v1528 = vsub.f32 %v1518, %v1526
        %v1529 = vmul.f32 %v1527, %v1527
        %v1530 = vmul.f32 %v1528, %v1528
        %v1531 = vsel %vm424, %v1529, 0.0
        %1532 = vadd.xlane.f32.xlu0 %v1531
        %v1533 = vpop.xlane.xlu0 %1532
        %v1534 = vsel %vm424, %v1530, 0.0
        %1535 = vadd.xlane.f32.xlu0 %v1534
        %v1536 = vpop.xlane.xlu0 %1535
        %v1537 = vmul.f32 %v1533, %v431
        %v1538 = vmul.f32 %v1536, %v431
        %v1539 = vadd.f32 %v1537, 1e-05
        %v1540 = vadd.f32 %v1538, 1e-05
        %v1541 = vrsqrt.pop %v1539
        %v1542 = vrsqrt.pop %v1540
        %v1543 = vmul.f32 %v1527, %v1541
        %v1544 = vmul.f32 %v1528, %v1542
        %v1545 = vlaneseq
        %v1546 = vshrl.u32 %v1545, 7
        %v1547 = vsub.s32 0, %v1546
        %v1548 = vrot.slane %v421, %v1547
        %v1549 = vmul.f32 %v1543, %v1548
        %v1550 = vmul.f32 %v1544, %v1548
        %v1551 = vlaneseq
        %v1552 = vshrl.u32 %v1551, 7
        %v1553 = vsub.s32 0, %v1552
        %v1554 = vrot.slane %v422, %v1553
        %v1555 = vadd.f32 %v1549, %v1554
        %v1556 = vadd.f32 %v1550, %v1554
        %v1557 = vpack.c.bf16 %v1555, %v1555
        %v1558 = vpack.c.bf16 %v1556, %v1556
        %v1559 = vld [vmem:[%s391] sm:$0xf]
        %v1560 = vld [vmem:[%s391 + $0x4] sm:$0xf]
        %v1561 = vld [vmem:[%s391 + $0x8] sm:$0xf]
        %v1562 = vld [vmem:[%s391 + $0xc] sm:$0xf]
        %v1563 = vld [vmem:[%s376] sm:$0x1]
        %v1565 = vlaneseq
        %v1566 = vshrl.u32 %v1565, 7
        %v1567 = vsub.s32 0, %v1566
        %v1568 = vrot.slane %v1563, %v1567
        %v1572 = vunpack.c.l.b16 %v1557
        %v1573 = vunpack.c.l.b16 %v1558
        %v1574 = vpack.c.b16 %v1573, %v1572
        %v1579 = vunpack.c.l.b16 %v1559
        %v1580 = vunpack.c.l.b16 %v1560
        %v1581 = vunpack.c.l.b16 %v1561
        %v1582 = vunpack.c.l.b16 %v1562
        %v1583 = vpack.c.b16 %v1580, %v1579
        %v1584 = vpack.c.b16 %v1582, %v1581
        %v1588 = vsel %vm424, %v1574, 0
        %1590 = vmatprep.subr.bf16.mxu0 0
        %1591 = vmatpush1.bf16.msra.mxu0 %v1583
        %1592 = vmatprep.subr.bf16.mxu0 0
        %1593 = vmatpush1.bf16.msra.mxu0 %v1584
        %1594 = vmatprep.subr.bf16.mxu0 0
        %1595 = vmatpush1.bf16.msra.mxu0 0
        %1596 = vmatprep.subr.bf16.mxu0 0
        %1597 = vmatpush1.bf16.msra.mxu0 0
        %1598 = vmatprep.subr.bf16.mxu0 0
        %1599 = vmatpush1.bf16.msra.mxu0 0
        %1600 = vmatprep.subr.bf16.mxu0 0
        %1601 = vmatpush1.bf16.msra.mxu0 0
        %1602 = vmatprep.subr.bf16.mxu0 0
        %1603 = vmatpush1.bf16.msra.mxu0 0
        %1604 = vmatprep.subr.bf16.mxu0 0
        %1605 = vmatpush1.bf16.msra.mxu0 0
        %1606 = vmatprep.subr.bf16.mxu0 0
        %1607 = vmatpush1.bf16.msra.mxu0 0
        %1608 = vmatprep.subr.bf16.mxu0 0
        %1609 = vmatpush1.bf16.msra.mxu0 0
        %1610 = vmatprep.subr.bf16.mxu0 0
        %1611 = vmatpush1.bf16.msra.mxu0 0
        %1612 = vmatprep.subr.bf16.mxu0 0
        %1613 = vmatpush1.bf16.msra.mxu0 0
        %1614 = vmatprep.subr.bf16.mxu0 0
        %1615 = vmatpush1.bf16.msra.mxu0 0
        %1616 = vmatprep.subr.bf16.mxu0 0
        %1617 = vmatpush1.bf16.msra.mxu0 0
        %1618 = vmatprep.subr.bf16.mxu0 0
        %1619 = vmatpush1.bf16.msra.mxu0 0
        %1620 = vmatprep.subr.bf16.mxu0 0
        %1621 = vmatpush1.bf16.msra.mxu0 0
        %1622 = vmatprep.mubr.bf16.mxu0 0
        %1623 = vmatmul.mubr.bf16.gmra.mrb[0].mxu0 %v1588
        %v1624 = vpop.f32.mrb[0].mxu0
        %v1625 = vadd.f32 %v1568, %v1624
        %v1626 = vpop.f32.mrb[0].mxu0
        %v1627 = vpop.f32.mrb[0].mxu0
        %v1628 = vadd.f32 %v1568, %v1627
        %v1629 = vpop.f32.mrb[0].mxu0
        %1630 = vdwg.mxu0
        %v1631 = vmax.f32 %v1625, 0.0
        %v1632 = vmax.f32 %v1628, 0.0
        %v1633 = vpack.c.bf16 %v1632, %v1631
        %v1634 = vld [vmem:[%s396] sm:$0xf]
        %v1635 = vld [vmem:[%s396 + $0x4] sm:$0xf]
        %v1636 = vld [vmem:[%s396 + $0x8] sm:$0xf]
        %v1637 = vld [vmem:[%s396 + $0xc] sm:$0xf]
        %v1638 = vld [vmem:[%s396 + $0x10] sm:$0xf]
        %v1639 = vld [vmem:[%s396 + $0x14] sm:$0xf]
        %v1640 = vld [vmem:[%s396 + $0x18] sm:$0xf]
        %v1641 = vld [vmem:[%s396 + $0x1c] sm:$0xf]
        %v1642 = vld [vmem:[%s396 + $0x20] sm:$0xf]
        %v1643 = vld [vmem:[%s396 + $0x24] sm:$0xf]
        %v1644 = vld [vmem:[%s396 + $0x28] sm:$0xf]
        %v1645 = vld [vmem:[%s396 + $0x2c] sm:$0xf]
        %v1646 = vld [vmem:[%s396 + $0x30] sm:$0xf]
        %v1647 = vld [vmem:[%s396 + $0x34] sm:$0xf]
        %v1648 = vld [vmem:[%s396 + $0x38] sm:$0xf]
        %v1649 = vld [vmem:[%s396 + $0x3c] sm:$0xf]
        %v1650 = vlaneseq
        %v1651 = vshrl.u32 %v1650, 7
        %v1652 = vsub.s32 0, %v1651
        %v1653 = vrot.slane %v423, %v1652
        %v1670 = vunpack.c.l.b16 %v1634
        %v1671 = vunpack.c.l.b16 %v1635
        %v1672 = vunpack.c.l.b16 %v1636
        %v1673 = vunpack.c.l.b16 %v1637
        %v1674 = vunpack.c.l.b16 %v1638
        %v1675 = vunpack.c.l.b16 %v1639
        %v1676 = vunpack.c.l.b16 %v1640
        %v1677 = vunpack.c.l.b16 %v1641
        %v1678 = vunpack.c.l.b16 %v1642
        %v1679 = vunpack.c.l.b16 %v1643
        %v1680 = vunpack.c.l.b16 %v1644
        %v1681 = vunpack.c.l.b16 %v1645
        %v1682 = vunpack.c.l.b16 %v1646
        %v1683 = vunpack.c.l.b16 %v1647
        %v1684 = vunpack.c.l.b16 %v1648
        %v1685 = vunpack.c.l.b16 %v1649
        %v1686 = vpack.c.b16 %v1671, %v1670
        %v1687 = vpack.c.b16 %v1673, %v1672
        %v1688 = vpack.c.b16 %v1675, %v1674
        %v1689 = vpack.c.b16 %v1677, %v1676
        %v1690 = vpack.c.b16 %v1679, %v1678
        %v1691 = vpack.c.b16 %v1681, %v1680
        %v1692 = vpack.c.b16 %v1683, %v1682
        %v1693 = vpack.c.b16 %v1685, %v1684
        %1702 = vmatprep.subr.bf16.mxu0 0
        %1703 = vmatpush1.bf16.msra.mxu0 %v1686
        %1704 = vmatprep.subr.bf16.mxu0 0
        %1705 = vmatpush1.bf16.msra.mxu0 %v1687
        %1706 = vmatprep.subr.bf16.mxu0 0
        %1707 = vmatpush1.bf16.msra.mxu0 %v1688
        %1708 = vmatprep.subr.bf16.mxu0 0
        %1709 = vmatpush1.bf16.msra.mxu0 %v1689
        %1710 = vmatprep.subr.bf16.mxu0 0
        %1711 = vmatpush1.bf16.msra.mxu0 %v1690
        %1712 = vmatprep.subr.bf16.mxu0 0
        %1713 = vmatpush1.bf16.msra.mxu0 %v1691
        %1714 = vmatprep.subr.bf16.mxu0 0
        %1715 = vmatpush1.bf16.msra.mxu0 %v1692
        %1716 = vmatprep.subr.bf16.mxu0 0
        %1717 = vmatpush1.bf16.msra.mxu0 %v1693
        %1718 = vmatprep.subr.bf16.mxu0 0
        %1719 = vmatpush1.bf16.msra.mxu0 0
        %1720 = vmatprep.subr.bf16.mxu0 0
        %1721 = vmatpush1.bf16.msra.mxu0 0
        %1722 = vmatprep.subr.bf16.mxu0 0
        %1723 = vmatpush1.bf16.msra.mxu0 0
        %1724 = vmatprep.subr.bf16.mxu0 0
        %1725 = vmatpush1.bf16.msra.mxu0 0
        %1726 = vmatprep.subr.bf16.mxu0 0
        %1727 = vmatpush1.bf16.msra.mxu0 0
        %1728 = vmatprep.subr.bf16.mxu0 0
        %1729 = vmatpush1.bf16.msra.mxu0 0
        %1730 = vmatprep.subr.bf16.mxu0 0
        %1731 = vmatpush1.bf16.msra.mxu0 0
        %1732 = vmatprep.subr.bf16.mxu0 0
        %1733 = vmatpush1.bf16.msra.mxu0 0
        %1734 = vmatprep.mubr.bf16.mxu0 0
        %1735 = vmatmul.mubr.bf16.gmra.mrb[0].mxu0 %v1633
        %v1736 = vpop.f32.mrb[0].mxu0
        %v1737 = vadd.f32 %v1653, %v1736
        %v1738 = vpop.f32.mrb[0].mxu0
        %v1739 = vpop.f32.mrb[0].mxu0
        %v1740 = vadd.f32 %v1653, %v1739
        %v1741 = vpop.f32.mrb[0].mxu0
        %1742 = vdwg.mxu0
        %v1743 = vadd.f32 %v1517, %v1737
        %v1744 = vadd.f32 %v1518, %v1740
        %1745 = vst.msk [vmem:[#allocation2] sm:$0xff] %vm424, %v1743
        %1746 = vst.msk [vmem:[#allocation2 + $0x8] sm:$0xff] %vm424, %v1744
        %p1747 = scmp.eq.s32.totalorder %s20, 3
        // Predicated region
        $region57: #{tpu_custom_call.1} parent=51 // pred_check
          %p1748 = pneg %p1747
        $region58: #{tpu_custom_call.1} parent=51 // pred_check_branch
          %1750 = sbr.rel (%p1748) target = $region60
        $region59: #{tpu_custom_call.1} parent=51 // pred_region
          %1751 = vst.msk [vmem:[#allocation4] sm:$0xff] %vm424, %v1743
          %1752 = vst.msk [vmem:[#allocation4 + $0x8] sm:$0xff] %vm424, %v1744
        $region60: #{tpu_custom_call.1} parent=51 // pred_fallthru
          _
        // Predicated region
        $region61: #{tpu_custom_call.1} parent=51 // pred_check
          %p1753 = pneg %p236
        $region62: #{tpu_custom_call.1} parent=51 // pred_check_branch
          %1755 = sbr.rel (%p1753) target = $region64
        $region63: #{tpu_custom_call.1} parent=51 // pred_region
          %s1757 = ssub.s32 256, 256
          %1758 = vsyncadd [#allocation5], %s1757
          %s1759 = sshll.u32 [#allocation4], 4
          %s1760 = int_to_ptr.vmem [resolvable:$true] %s1759
          %1765 = dma.vmem_to_hbm [thread:$0]  %s1760, 256, %s8, [#allocation5], 128, 128, 8
        $region64: #{tpu_custom_call.1} parent=51 // pred_fallthru
          _
        // Predicated region
        $region65: #{tpu_custom_call.1} parent=51 // pred_check
          %p1766 = pneg %p236
        $region66: #{tpu_custom_call.1} parent=51 // pred_check_branch
          %1768 = sbr.rel (%p1766) target = $region68
        $region67: #{tpu_custom_call.1} parent=51 // pred_region
          %1769 = dma.done [#allocation5], 256
        $region68: #{tpu_custom_call.1} parent=51 // pred_fallthru
          _
      $region52: #{tpu_custom_call.1} parent=5 // pred_fallthru
        _
      %p1770 = scmp.le.s32.totalorder 2, %s15
      // Predicated region
      $region69: #{tpu_custom_call.1} parent=5 // pred_check
        %p1771 = pneg %p1770
      $region70: #{tpu_custom_call.1} parent=5 // pred_check_branch
        %1773 = sbr.rel (%p1771) target = $region72
      $region71: #{tpu_custom_call.1} parent=5 // pred_region
        %s1774 = ssub.s32 %s15, 2
      $region72: #{tpu_custom_call.1} parent=5 // pred_fallthru
        _
    $region6: #{tpu_custom_call.1} parent=1 // loop_footer
      %s19 = sadd.s32 1, %s15
    $region7: #{tpu_custom_call.1} parent=1 // loop_footer_branch
      %14 = sbr.rel target = $region3
    $region8: #{tpu_custom_call.1} parent=1 // loop_exit
      _
    %1775 = vsyncpa [#allocation5], 1
    %s1776 = scalar_lea.sflag [#allocation5], 1
    %1777 = vsyncpa %s1776, 1

</llo_original>
